<compile_context>
chip_gen: v5e
topology: v5e:2x2
jax: 0.10.0
libtpu: 0.0.40
codegen_flags: <defaults>
</compile_context>

<pallas_src>
import jax
import jax.numpy as jnp
from jax.experimental import pallas as pl
from jax.experimental.pallas import tpu as pltpu

INPUT_SIZE = 64       # embedding dim fed to the LSTM
HIDDEN_SIZE = 128     # LSTM hidden size
HALF_HIDDEN = HIDDEN_SIZE // 2
NUM_TASKS = 7
INFO_DIM = 8          # per-layer "layer_info" feature width
AUG_DIM = INFO_DIM + 2          # [info | rank | prune]
AUG_PAD = 16                    # padded augmented-K width
BN_EPS = 1e-5
HEAD_PAD = 512        # NUM_TASKS * HALF_HIDDEN = 448 -> padded to 512 lanes
OUT_PAD = 128         # lane-dense output width (first NUM_TASKS lanes valid)

_VMEM = pl.BlockSpec(memory_space=pltpu.MemorySpace.VMEM)


# ---------------------------------------------------------------------------
# Fused kernel: gates matmul -> LSTM -> neck -> task heads
# ---------------------------------------------------------------------------
def fused_kernel(x_aug_ref, pe_fold_ref, w_aug_ref, whh_ref,
                 neck_w_ref, head_w1_ref, head_w2_ref, bias_ref,
                 out_ref, gates_ref):
    SB = x_aug_ref.shape[0]         # S * Bp (sublane aligned)
    Bp = out_ref.shape[0]           # padded batch (multiple of 8)
    S = SB // Bp
    H = whh_ref.shape[0]            # 128

    # ---- All gate pre-activations in one augmented-K matmul (MXU) ----------
    # PE_fold already contains (pos_enc + fused encoder bias) @ W_ih + lstm_b.
    gates_ref[...] = jnp.dot(
        x_aug_ref[...].astype(jnp.bfloat16), w_aug_ref[...],
        preferred_element_type=jnp.float32) + pe_fold_ref[...]          # (SB, 4H)

    # ---- LSTM recurrence (fori_loop unroll=True, scratch-staged slabs) -----
    def step(t, carry):
        h, c = carry
        start = pl.multiple_of(t * Bp, 8)
        g = gates_ref[pl.ds(start, Bp), :] + jnp.dot(
            h.astype(jnp.bfloat16), whh_ref[...],
            preferred_element_type=jnp.float32)                          # (Bp, 4H)
        i = jax.nn.sigmoid(g[:, 0 * H:1 * H])
        f = jax.nn.sigmoid(g[:, 1 * H:2 * H])
        gg = jnp.tanh(g[:, 2 * H:3 * H])
        o = jax.nn.sigmoid(g[:, 3 * H:4 * H])
        c = f * c + i * gg
        h = o * jnp.tanh(c)
        return h, c

    h0 = jnp.zeros((Bp, H), jnp.float32)
    c0 = jnp.zeros((Bp, H), jnp.float32)
    h, _ = jax.lax.fori_loop(0, S, step, (h0, c0), unroll=True)

    # ---- Neck: Linear (BN scale folded in) + ReLU (dropout = identity) -----
    neck_b = bias_ref[0:1, 0:H]                                          # (1, 128)
    x = jnp.maximum(
        jnp.dot(h.astype(jnp.bfloat16), neck_w_ref[...],
                preferred_element_type=jnp.float32) + neck_b, 0.0)

    # ---- Heads: fused first-layer matmul + block-diagonal second stage -----
    head_b1 = bias_ref[1:2, :]                                           # (1, 512)
    y = jnp.maximum(
        jnp.dot(x.astype(jnp.bfloat16), head_w1_ref[...],
                preferred_element_type=jnp.float32) + head_b1, 0.0)      # (Bp, 512)
    head_b2 = bias_ref[2:3, 0:OUT_PAD]                                   # (1, 128)
    z = jnp.dot(y.astype(jnp.bfloat16), head_w2_ref[...],
                preferred_element_type=jnp.float32) + head_b2            # (Bp, 128)
    out_ref[...] = z                                                     # lane-dense


# ---------------------------------------------------------------------------
# Parameter construction (raw, torch-like) and host-side inference folds
# ---------------------------------------------------------------------------
def _kaiming(key, fan_in, shape):
    return jax.random.normal(key, shape, jnp.float32) * jnp.sqrt(2.0 / fan_in)


def _sinusoidal_pe(S, D):
    pos = jnp.arange(S, dtype=jnp.float32)[:, None]
    div = jnp.exp(jnp.arange(0, D, 2, dtype=jnp.float32) * (-jnp.log(10000.0) / D))
    pe = jnp.zeros((S, D), jnp.float32)
    pe = pe.at[:, 0::2].set(jnp.sin(pos * div))
    pe = pe.at[:, 1::2].set(jnp.cos(pos * div))
    return pe


def make_params(seed=0):
    keys = jax.random.split(jax.random.PRNGKey(seed), 16)
    D, H, H2, T = INPUT_SIZE, HIDDEN_SIZE, HALF_HIDDEN, NUM_TASKS
    p = {}
    # encoders (stored as (in_features, out_features))
    p["w_info"] = _kaiming(keys[0], INFO_DIM, (INFO_DIM, D))
    p["b_info"] = jnp.zeros((1, D), jnp.float32)
    p["w_rank"] = _kaiming(keys[1], 1, (1, D))
    p["b_rank"] = jnp.zeros((1, D), jnp.float32)
    p["w_prune"] = _kaiming(keys[2], 1, (1, D))
    p["b_prune"] = jnp.zeros((1, D), jnp.float32)
    p["fusion_alpha"] = jax.random.normal(keys[3], (3,), jnp.float32) * 0.1
    # LSTM (weights stored transposed: (in, 4H), gate order i|f|g|o); biases 0
    p["lstm_wih"] = _kaiming(keys[4], D, (D, 4 * H))
    p["lstm_whh"] = _kaiming(keys[5], H, (H, 4 * H))
    p["lstm_b"] = jnp.zeros((1, 4 * H), jnp.float32)
    # neck
    p["neck_w"] = _kaiming(keys[6], H, (H, H))
    p["neck_b"] = jax.random.uniform(keys[7], (1, H), jnp.float32,
                                     -1.0 / jnp.sqrt(H), 1.0 / jnp.sqrt(H))
    # task heads (stacked)
    p["head_w1"] = _kaiming(keys[8], H, (T, H, H2))
    p["head_b1"] = jax.random.uniform(keys[9], (T, H2), jnp.float32,
                                      -1.0 / jnp.sqrt(H), 1.0 / jnp.sqrt(H))
    p["head_w2"] = _kaiming(keys[10], H2, (T, H2))
    p["head_b2"] = jax.random.uniform(keys[11], (1, T), jnp.float32,
                                      -1.0 / jnp.sqrt(H2), 1.0 / jnp.sqrt(H2))
    return p


def prepare_inference_params(p, S, Bp):
    """One-time host-side folds (per (S, Bp)): fusion softmax, prologue fold
    into W_ih, positional-encoding fold, BN(eval) scale, head packing, bias
    slab packing, bf16 casts for matmul operands."""
    D, H, H2, T = INPUT_SIZE, HIDDEN_SIZE, HALF_HIDDEN, NUM_TASKS
    bn = 1.0 / jnp.sqrt(1.0 + BN_EPS)        # eval BN: mu=0, var=1, gamma=1, beta=0
    fw = jax.nn.softmax(p["fusion_alpha"])   # order: (prune, rank, info)

    q = {}
    # ---- embedding prologue folded into the W_ih matmul (augmented K) ------
    w_concat = jnp.concatenate(
        [p["w_info"] * fw[2],
         p["w_rank"] * fw[1],
         p["w_prune"] * fw[0],
         jnp.zeros((AUG_PAD - AUG_DIM, D), jnp.float32)], axis=0)        # (16, 64)
    q["w_aug"] = (w_concat @ p["lstm_wih"]).astype(jnp.bfloat16)         # (16, 512)

    bias_fused = (fw[0] * p["b_prune"] + fw[1] * p["b_rank"]
                  + fw[2] * p["b_info"])                                 # (1, 64)
    pe = _sinusoidal_pe(S, D)                                            # (S, 64)
    pe_fold = (pe + bias_fused) @ p["lstm_wih"] + p["lstm_b"]            # (S, 512)
    q["pe_fold"] = jnp.repeat(pe_fold, Bp, axis=0)                       # (S*Bp, 512)

    # ---- LSTM recurrent weight ----------------------------------------------
    q["lstm_whh"] = p["lstm_whh"].astype(jnp.bfloat16)                   # (128, 512)

    # ---- neck with BN folded -------------------------------------------------
    q["neck_w"] = (p["neck_w"] * bn).astype(jnp.bfloat16)                # (128, 128)

    # ---- heads: stacked first layers (BN folded), block-diag second stage ---
    w1 = jnp.concatenate([p["head_w1"][t] for t in range(T)], axis=1) * bn
    q["head_w1"] = jnp.pad(w1, ((0, 0), (0, HEAD_PAD - T * H2))).astype(jnp.bfloat16)
    w2 = jnp.zeros((HEAD_PAD, OUT_PAD), jnp.float32)
    for t in range(T):
        w2 = w2.at[t * H2:(t + 1) * H2, t].set(p["head_w2"][t])
    q["head_w2"] = w2.astype(jnp.bfloat16)                               # (512, 128)

    # ---- pack remaining bias rows into one (8, 512) f32 slab ----------------
    bias_slab = jnp.zeros((8, HEAD_PAD), jnp.float32)
    bias_slab = bias_slab.at[0, :H].set(p["neck_b"][0] * bn)
    bias_slab = bias_slab.at[1, :T * H2].set(p["head_b1"].reshape(T * H2) * bn)
    bias_slab = bias_slab.at[2, :T].set(p["head_b2"][0])
    q["bias_slab"] = bias_slab
    return q


# ---------------------------------------------------------------------------
# Full forward pass
# ---------------------------------------------------------------------------
@jax.jit
def performance_predictor_forward(layer_info, rank_list, prune_list, q):
    B, S, _ = layer_info.shape
    Bp = ((B + 7) // 8) * 8                    # pad batch to sublane multiple
    pad = Bp - B
    assert q["pe_fold"].shape[0] == S * Bp, "q must be prepared for this (S, Bp)"

    li = jnp.pad(layer_info.astype(jnp.float32), ((0, pad), (0, 0), (0, 0)))
    rk = jnp.pad(rank_list.astype(jnp.float32), ((0, pad), (0, 0)))[..., None]
    pr = jnp.pad(prune_list.astype(jnp.float32), ((0, pad), (0, 0)))[..., None]
    zp = jnp.zeros((Bp, S, AUG_PAD - AUG_DIM), jnp.float32)

    # augmented feature block, sequence-major: row index = s * Bp + b
    x_aug = jnp.concatenate([li, rk, pr, zp], axis=-1)                   # (Bp,S,16)
    x_aug_sm = jnp.swapaxes(x_aug, 0, 1).reshape(S * Bp, AUG_PAD)        # (S*Bp,16)

    # No grid / dimension_semantics: at this size the kernel is a pure latency
    # chain; shard over batch only once Bp reaches the several-hundreds.
    out = pl.pallas_call(
        fused_kernel,
        out_shape=jax.ShapeDtypeStruct((Bp, OUT_PAD), jnp.float32),
        in_specs=[_VMEM] * 8,
        out_specs=_VMEM,
        scratch_shapes=[pltpu.VMEM((S * Bp, 4 * HIDDEN_SIZE), jnp.float32)],
    )(x_aug_sm, q["pe_fold"], q["w_aug"], q["lstm_whh"],
      q["neck_w"], q["head_w1"], q["head_w2"], q["bias_slab"])

    return out[:B, :NUM_TASKS]


# ---------------------------------------------------------------------------
# Pure-JAX f32 reference (raw, un-folded parameters) for correctness check
# ---------------------------------------------------------------------------
def reference_forward(layer_info, rank_list, prune_list, p):
    B, S, _ = layer_info.shape
    D, H, H2, T = INPUT_SIZE, HIDDEN_SIZE, HALF_HIDDEN, NUM_TASKS
    fw = jax.nn.softmax(p["fusion_alpha"])
    info_e = layer_info.reshape(B * S, INFO_DIM) @ p["w_info"] + p["b_info"]
    rank_e = rank_list.reshape(B * S, 1) @ p["w_rank"] + p["b_rank"]
    prune_e = prune_list.reshape(B * S, 1) @ p["w_prune"] + p["b_prune"]
    emb = fw[0] * prune_e + fw[1] * rank_e + fw[2] * info_e
    x = emb.reshape(B, S, D) + _sinusoidal_pe(S, D)[None]
    h = jnp.zeros((B, H), jnp.float32)
    c = jnp.zeros((B, H), jnp.float32)
    for t in range(S):
        g = x[:, t, :] @ p["lstm_wih"] + h @ p["lstm_whh"] + p["lstm_b"]
        i = jax.nn.sigmoid(g[:, :H])
        f = jax.nn.sigmoid(g[:, H:2 * H])
        gg = jnp.tanh(g[:, 2 * H:3 * H])
        o = jax.nn.sigmoid(g[:, 3 * H:])
        c = f * c + i * gg
        h = o * jnp.tanh(c)
    bn = 1.0 / jnp.sqrt(1.0 + BN_EPS)
    xh = jnp.maximum((h @ p["neck_w"] + p["neck_b"]) * bn, 0.0)
    outs = []
    for t in range(T):
        y = jnp.maximum((xh @ p["head_w1"][t] + p["head_b1"][t]) * bn, 0.0)
        outs.append(y @ p["head_w2"][t] + p["head_b2"][0, t])
    return jnp.stack(outs, axis=1)


if __name__ == "__main__":
    B, S = 2, 8
    key = jax.random.PRNGKey(0)
    k1, k2, k3 = jax.random.split(key, 3)
    layer_info = jax.random.normal(k1, (B, S, INFO_DIM), jnp.float32)
    rank_list = jax.random.uniform(k2, (B, S), jnp.float32)
    prune_list = jax.random.uniform(k3, (B, S), jnp.float32)

    Bp = ((B + 7) // 8) * 8
    raw_params = make_params(seed=0)
    inf_params = prepare_inference_params(raw_params, S, Bp)

    out = performance_predictor_forward(layer_info, rank_list, prune_list, inf_params)
    out = jax.block_until_ready(out)

    assert out.shape == (B, NUM_TASKS) and out.dtype == jnp.float32
    assert bool(jnp.all(jnp.isfinite(out)))

    ref = reference_forward(layer_info, rank_list, prune_list, raw_params)
    max_err = float(jnp.max(jnp.abs(out - ref)))
    assert max_err < 1e-1, f"kernel vs f32 reference mismatch: {max_err}"
    print("KERNEL_OK")
</pallas_src>

<mosaic_0001>
module attributes {stable_mosaic.version = 11 : i64} {
  func.func @fused_kernel(%arg0: memref<64x16xf32, #tpu.memory_space<vmem>>, %arg1: memref<64x512xf32, #tpu.memory_space<vmem>>, %arg2: memref<16x512xbf16, #tpu.memory_space<vmem>>, %arg3: memref<128x512xbf16, #tpu.memory_space<vmem>>, %arg4: memref<128x128xbf16, #tpu.memory_space<vmem>>, %arg5: memref<128x512xbf16, #tpu.memory_space<vmem>>, %arg6: memref<512x128xbf16, #tpu.memory_space<vmem>>, %arg7: memref<8x512xf32, #tpu.memory_space<vmem>>, %arg8: memref<8x128xf32, #tpu.memory_space<vmem>>, %arg9: memref<64x512xf32, #tpu.memory_space<vmem>>) attributes {dimension_semantics = [], scalar_prefetch = 0 : i64, scratch_operands = 1 : i64, tpu.core_type = #tpu.core_type<tc>} {
    %c0 = arith.constant 0 : index
    %c0_0 = arith.constant 0 : index
    %0 = vector.load %arg0[%c0, %c0_0] : memref<64x16xf32, #tpu.memory_space<vmem>>, vector<64x16xf32>
    %1 = arith.truncf %0 : vector<64x16xf32> to vector<64x16xbf16>
    %c0_1 = arith.constant 0 : index
    %c0_2 = arith.constant 0 : index
    %2 = vector.load %arg2[%c0_1, %c0_2] : memref<16x512xbf16, #tpu.memory_space<vmem>>, vector<16x512xbf16>
    %cst = arith.constant dense<0.000000e+00> : vector<64x512xf32>
    %3 = tpu.matmul %1, %2, %cst {dimension_numbers = #tpu.dot_dimension_numbers<[1], [0], [0], [1], [0, 0, 1, 1], [], []>} : vector<64x16xbf16>, vector<16x512xbf16>, vector<64x512xf32> -> vector<64x512xf32>
    %c0_3 = arith.constant 0 : index
    %c0_4 = arith.constant 0 : index
    %4 = vector.load %arg1[%c0_3, %c0_4] : memref<64x512xf32, #tpu.memory_space<vmem>>, vector<64x512xf32>
    %5 = arith.addf %3, %4 : vector<64x512xf32>
    %c0_5 = arith.constant 0 : index
    %c0_6 = arith.constant 0 : index
    %6 = vector.load %arg9[%c0_5, %c0_6] : memref<64x512xf32, #tpu.memory_space<vmem>>, vector<64x512xf32>
    tpu.vector_store %arg9[%c0_5, %c0_6], %5 {strides = array<i32>} : memref<64x512xf32, #tpu.memory_space<vmem>>, vector<64x512xf32>,
    %cst_7 = arith.constant 0.000000e+00 : f32
    %7 = vector.broadcast %cst_7 : f32 to vector<8x128xf32>
    %cst_8 = arith.constant 0.000000e+00 : f32
    %8 = vector.broadcast %cst_8 : f32 to vector<8x128xf32>
    %c0_i32 = arith.constant 0 : i32
    %c8_i32 = arith.constant 8 : i32
    %9 = arith.muli %c0_i32, %c8_i32 : i32
    %10 = tpu.assume_multiple %9, 8 : i32
    %11 = arith.index_cast %10 : i32 to index
    %c0_9 = arith.constant 0 : index
    %12 = vector.load %arg9[%11, %c0_9] : memref<64x512xf32, #tpu.memory_space<vmem>>, vector<8x512xf32>
    %13 = arith.truncf %7 : vector<8x128xf32> to vector<8x128xbf16>
    %c0_10 = arith.constant 0 : index
    %c0_11 = arith.constant 0 : index
    %14 = vector.load %arg3[%c0_10, %c0_11] : memref<128x512xbf16, #tpu.memory_space<vmem>>, vector<128x512xbf16>
    %cst_12 = arith.constant dense<0.000000e+00> : vector<8x512xf32>
    %15 = tpu.matmul %13, %14, %cst_12 {dimension_numbers = #tpu.dot_dimension_numbers<[1], [0], [0], [1], [0, 0, 1, 1], [], []>} : vector<8x128xbf16>, vector<128x512xbf16>, vector<8x512xf32> -> vector<8x512xf32>
    %16 = arith.addf %12, %15 : vector<8x512xf32>
    %17 = vector.extract_strided_slice %16 {offsets = [0, 0], sizes = [8, 128], strides = [1, 1]} : vector<8x512xf32> to vector<8x128xf32>
    %18 = arith.negf %17 : vector<8x128xf32>
    %19 = math.exp %18 : vector<8x128xf32>
    %cst_13 = arith.constant 1.000000e+00 : f32
    %20 = vector.broadcast %cst_13 : f32 to vector<8x128xf32>
    %21 = arith.addf %20, %19 : vector<8x128xf32>
    %22 = arith.divf %20, %21 : vector<8x128xf32>
    %23 = vector.extract_strided_slice %16 {offsets = [0, 128], sizes = [8, 128], strides = [1, 1]} : vector<8x512xf32> to vector<8x128xf32>
    %24 = arith.negf %23 : vector<8x128xf32>
    %25 = math.exp %24 : vector<8x128xf32>
    %cst_14 = arith.constant 1.000000e+00 : f32
    %26 = vector.broadcast %cst_14 : f32 to vector<8x128xf32>
    %27 = arith.addf %26, %25 : vector<8x128xf32>
    %28 = arith.divf %26, %27 : vector<8x128xf32>
    %29 = vector.extract_strided_slice %16 {offsets = [0, 256], sizes = [8, 128], strides = [1, 1]} : vector<8x512xf32> to vector<8x128xf32>
    %30 = math.tanh %29 : vector<8x128xf32>
    %31 = vector.extract_strided_slice %16 {offsets = [0, 384], sizes = [8, 128], strides = [1, 1]} : vector<8x512xf32> to vector<8x128xf32>
    %32 = arith.negf %31 : vector<8x128xf32>
    %33 = math.exp %32 : vector<8x128xf32>
    %cst_15 = arith.constant 1.000000e+00 : f32
    %34 = vector.broadcast %cst_15 : f32 to vector<8x128xf32>
    %35 = arith.addf %34, %33 : vector<8x128xf32>
    %36 = arith.divf %34, %35 : vector<8x128xf32>
    %37 = arith.mulf %28, %8 : vector<8x128xf32>
    %38 = arith.mulf %22, %30 : vector<8x128xf32>
    %39 = arith.addf %37, %38 : vector<8x128xf32>
    %40 = math.tanh %39 : vector<8x128xf32>
    %41 = arith.mulf %36, %40 : vector<8x128xf32>
    %c1_i32 = arith.constant 1 : i32
    %c8_i32_16 = arith.constant 8 : i32
    %42 = arith.muli %c1_i32, %c8_i32_16 : i32
    %43 = tpu.assume_multiple %42, 8 : i32
    %44 = arith.index_cast %43 : i32 to index
    %c0_17 = arith.constant 0 : index
    %45 = vector.load %arg9[%44, %c0_17] : memref<64x512xf32, #tpu.memory_space<vmem>>, vector<8x512xf32>
    %46 = arith.truncf %41 : vector<8x128xf32> to vector<8x128xbf16>
    %c0_18 = arith.constant 0 : index
    %c0_19 = arith.constant 0 : index
    %47 = vector.load %arg3[%c0_18, %c0_19] : memref<128x512xbf16, #tpu.memory_space<vmem>>, vector<128x512xbf16>
    %cst_20 = arith.constant dense<0.000000e+00> : vector<8x512xf32>
    %48 = tpu.matmul %46, %47, %cst_20 {dimension_numbers = #tpu.dot_dimension_numbers<[1], [0], [0], [1], [0, 0, 1, 1], [], []>} : vector<8x128xbf16>, vector<128x512xbf16>, vector<8x512xf32> -> vector<8x512xf32>
    %49 = arith.addf %45, %48 : vector<8x512xf32>
    %50 = vector.extract_strided_slice %49 {offsets = [0, 0], sizes = [8, 128], strides = [1, 1]} : vector<8x512xf32> to vector<8x128xf32>
    %51 = arith.negf %50 : vector<8x128xf32>
    %52 = math.exp %51 : vector<8x128xf32>
    %cst_21 = arith.constant 1.000000e+00 : f32
    %53 = vector.broadcast %cst_21 : f32 to vector<8x128xf32>
    %54 = arith.addf %53, %52 : vector<8x128xf32>
    %55 = arith.divf %53, %54 : vector<8x128xf32>
    %56 = vector.extract_strided_slice %49 {offsets = [0, 128], sizes = [8, 128], strides = [1, 1]} : vector<8x512xf32> to vector<8x128xf32>
    %57 = arith.negf %56 : vector<8x128xf32>
    %58 = math.exp %57 : vector<8x128xf32>
    %cst_22 = arith.constant 1.000000e+00 : f32
    %59 = vector.broadcast %cst_22 : f32 to vector<8x128xf32>
    %60 = arith.addf %59, %58 : vector<8x128xf32>
    %61 = arith.divf %59, %60 : vector<8x128xf32>
    %62 = vector.extract_strided_slice %49 {offsets = [0, 256], sizes = [8, 128], strides = [1, 1]} : vector<8x512xf32> to vector<8x128xf32>
    %63 = math.tanh %62 : vector<8x128xf32>
    %64 = vector.extract_strided_slice %49 {offsets = [0, 384], sizes = [8, 128], strides = [1, 1]} : vector<8x512xf32> to vector<8x128xf32>
    %65 = arith.negf %64 : vector<8x128xf32>
    %66 = math.exp %65 : vector<8x128xf32>
    %cst_23 = arith.constant 1.000000e+00 : f32
    %67 = vector.broadcast %cst_23 : f32 to vector<8x128xf32>
    %68 = arith.addf %67, %66 : vector<8x128xf32>
    %69 = arith.divf %67, %68 : vector<8x128xf32>
    %70 = arith.mulf %61, %39 : vector<8x128xf32>
    %71 = arith.mulf %55, %63 : vector<8x128xf32>
    %72 = arith.addf %70, %71 : vector<8x128xf32>
    %73 = math.tanh %72 : vector<8x128xf32>
    %74 = arith.mulf %69, %73 : vector<8x128xf32>
    %c2_i32 = arith.constant 2 : i32
    %c8_i32_24 = arith.constant 8 : i32
    %75 = arith.muli %c2_i32, %c8_i32_24 : i32
    %76 = tpu.assume_multiple %75, 8 : i32
    %77 = arith.index_cast %76 : i32 to index
    %c0_25 = arith.constant 0 : index
    %78 = vector.load %arg9[%77, %c0_25] : memref<64x512xf32, #tpu.memory_space<vmem>>, vector<8x512xf32>
    %79 = arith.truncf %74 : vector<8x128xf32> to vector<8x128xbf16>
    %c0_26 = arith.constant 0 : index
    %c0_27 = arith.constant 0 : index
    %80 = vector.load %arg3[%c0_26, %c0_27] : memref<128x512xbf16, #tpu.memory_space<vmem>>, vector<128x512xbf16>
    %cst_28 = arith.constant dense<0.000000e+00> : vector<8x512xf32>
    %81 = tpu.matmul %79, %80, %cst_28 {dimension_numbers = #tpu.dot_dimension_numbers<[1], [0], [0], [1], [0, 0, 1, 1], [], []>} : vector<8x128xbf16>, vector<128x512xbf16>, vector<8x512xf32> -> vector<8x512xf32>
    %82 = arith.addf %78, %81 : vector<8x512xf32>
    %83 = vector.extract_strided_slice %82 {offsets = [0, 0], sizes = [8, 128], strides = [1, 1]} : vector<8x512xf32> to vector<8x128xf32>
    %84 = arith.negf %83 : vector<8x128xf32>
    %85 = math.exp %84 : vector<8x128xf32>
    %cst_29 = arith.constant 1.000000e+00 : f32
    %86 = vector.broadcast %cst_29 : f32 to vector<8x128xf32>
    %87 = arith.addf %86, %85 : vector<8x128xf32>
    %88 = arith.divf %86, %87 : vector<8x128xf32>
    %89 = vector.extract_strided_slice %82 {offsets = [0, 128], sizes = [8, 128], strides = [1, 1]} : vector<8x512xf32> to vector<8x128xf32>
    %90 = arith.negf %89 : vector<8x128xf32>
    %91 = math.exp %90 : vector<8x128xf32>
    %cst_30 = arith.constant 1.000000e+00 : f32
    %92 = vector.broadcast %cst_30 : f32 to vector<8x128xf32>
    %93 = arith.addf %92, %91 : vector<8x128xf32>
    %94 = arith.divf %92, %93 : vector<8x128xf32>
    %95 = vector.extract_strided_slice %82 {offsets = [0, 256], sizes = [8, 128], strides = [1, 1]} : vector<8x512xf32> to vector<8x128xf32>
    %96 = math.tanh %95 : vector<8x128xf32>
    %97 = vector.extract_strided_slice %82 {offsets = [0, 384], sizes = [8, 128], strides = [1, 1]} : vector<8x512xf32> to vector<8x128xf32>
    %98 = arith.negf %97 : vector<8x128xf32>
    %99 = math.exp %98 : vector<8x128xf32>
    %cst_31 = arith.constant 1.000000e+00 : f32
    %100 = vector.broadcast %cst_31 : f32 to vector<8x128xf32>
    %101 = arith.addf %100, %99 : vector<8x128xf32>
    %102 = arith.divf %100, %101 : vector<8x128xf32>
    %103 = arith.mulf %94, %72 : vector<8x128xf32>
    %104 = arith.mulf %88, %96 : vector<8x128xf32>
    %105 = arith.addf %103, %104 : vector<8x128xf32>
    %106 = math.tanh %105 : vector<8x128xf32>
    %107 = arith.mulf %102, %106 : vector<8x128xf32>
    %c3_i32 = arith.constant 3 : i32
    %c8_i32_32 = arith.constant 8 : i32
    %108 = arith.muli %c3_i32, %c8_i32_32 : i32
    %109 = tpu.assume_multiple %108, 8 : i32
    %110 = arith.index_cast %109 : i32 to index
    %c0_33 = arith.constant 0 : index
    %111 = vector.load %arg9[%110, %c0_33] : memref<64x512xf32, #tpu.memory_space<vmem>>, vector<8x512xf32>
    %112 = arith.truncf %107 : vector<8x128xf32> to vector<8x128xbf16>
    %c0_34 = arith.constant 0 : index
    %c0_35 = arith.constant 0 : index
    %113 = vector.load %arg3[%c0_34, %c0_35] : memref<128x512xbf16, #tpu.memory_space<vmem>>, vector<128x512xbf16>
    %cst_36 = arith.constant dense<0.000000e+00> : vector<8x512xf32>
    %114 = tpu.matmul %112, %113, %cst_36 {dimension_numbers = #tpu.dot_dimension_numbers<[1], [0], [0], [1], [0, 0, 1, 1], [], []>} : vector<8x128xbf16>, vector<128x512xbf16>, vector<8x512xf32> -> vector<8x512xf32>
    %115 = arith.addf %111, %114 : vector<8x512xf32>
    %116 = vector.extract_strided_slice %115 {offsets = [0, 0], sizes = [8, 128], strides = [1, 1]} : vector<8x512xf32> to vector<8x128xf32>
    %117 = arith.negf %116 : vector<8x128xf32>
    %118 = math.exp %117 : vector<8x128xf32>
    %cst_37 = arith.constant 1.000000e+00 : f32
    %119 = vector.broadcast %cst_37 : f32 to vector<8x128xf32>
    %120 = arith.addf %119, %118 : vector<8x128xf32>
    %121 = arith.divf %119, %120 : vector<8x128xf32>
    %122 = vector.extract_strided_slice %115 {offsets = [0, 128], sizes = [8, 128], strides = [1, 1]} : vector<8x512xf32> to vector<8x128xf32>
    %123 = arith.negf %122 : vector<8x128xf32>
    %124 = math.exp %123 : vector<8x128xf32>
    %cst_38 = arith.constant 1.000000e+00 : f32
    %125 = vector.broadcast %cst_38 : f32 to vector<8x128xf32>
    %126 = arith.addf %125, %124 : vector<8x128xf32>
    %127 = arith.divf %125, %126 : vector<8x128xf32>
    %128 = vector.extract_strided_slice %115 {offsets = [0, 256], sizes = [8, 128], strides = [1, 1]} : vector<8x512xf32> to vector<8x128xf32>
    %129 = math.tanh %128 : vector<8x128xf32>
    %130 = vector.extract_strided_slice %115 {offsets = [0, 384], sizes = [8, 128], strides = [1, 1]} : vector<8x512xf32> to vector<8x128xf32>
    %131 = arith.negf %130 : vector<8x128xf32>
    %132 = math.exp %131 : vector<8x128xf32>
    %cst_39 = arith.constant 1.000000e+00 : f32
    %133 = vector.broadcast %cst_39 : f32 to vector<8x128xf32>
    %134 = arith.addf %133, %132 : vector<8x128xf32>
    %135 = arith.divf %133, %134 : vector<8x128xf32>
    %136 = arith.mulf %127, %105 : vector<8x128xf32>
    %137 = arith.mulf %121, %129 : vector<8x128xf32>
    %138 = arith.addf %136, %137 : vector<8x128xf32>
    %139 = math.tanh %138 : vector<8x128xf32>
    %140 = arith.mulf %135, %139 : vector<8x128xf32>
    %c4_i32 = arith.constant 4 : i32
    %c8_i32_40 = arith.constant 8 : i32
    %141 = arith.muli %c4_i32, %c8_i32_40 : i32
    %142 = tpu.assume_multiple %141, 8 : i32
    %143 = arith.index_cast %142 : i32 to index
    %c0_41 = arith.constant 0 : index
    %144 = vector.load %arg9[%143, %c0_41] : memref<64x512xf32, #tpu.memory_space<vmem>>, vector<8x512xf32>
    %145 = arith.truncf %140 : vector<8x128xf32> to vector<8x128xbf16>
    %c0_42 = arith.constant 0 : index
    %c0_43 = arith.constant 0 : index
    %146 = vector.load %arg3[%c0_42, %c0_43] : memref<128x512xbf16, #tpu.memory_space<vmem>>, vector<128x512xbf16>
    %cst_44 = arith.constant dense<0.000000e+00> : vector<8x512xf32>
    %147 = tpu.matmul %145, %146, %cst_44 {dimension_numbers = #tpu.dot_dimension_numbers<[1], [0], [0], [1], [0, 0, 1, 1], [], []>} : vector<8x128xbf16>, vector<128x512xbf16>, vector<8x512xf32> -> vector<8x512xf32>
    %148 = arith.addf %144, %147 : vector<8x512xf32>
    %149 = vector.extract_strided_slice %148 {offsets = [0, 0], sizes = [8, 128], strides = [1, 1]} : vector<8x512xf32> to vector<8x128xf32>
    %150 = arith.negf %149 : vector<8x128xf32>
    %151 = math.exp %150 : vector<8x128xf32>
    %cst_45 = arith.constant 1.000000e+00 : f32
    %152 = vector.broadcast %cst_45 : f32 to vector<8x128xf32>
    %153 = arith.addf %152, %151 : vector<8x128xf32>
    %154 = arith.divf %152, %153 : vector<8x128xf32>
    %155 = vector.extract_strided_slice %148 {offsets = [0, 128], sizes = [8, 128], strides = [1, 1]} : vector<8x512xf32> to vector<8x128xf32>
    %156 = arith.negf %155 : vector<8x128xf32>
    %157 = math.exp %156 : vector<8x128xf32>
    %cst_46 = arith.constant 1.000000e+00 : f32
    %158 = vector.broadcast %cst_46 : f32 to vector<8x128xf32>
    %159 = arith.addf %158, %157 : vector<8x128xf32>
    %160 = arith.divf %158, %159 : vector<8x128xf32>
    %161 = vector.extract_strided_slice %148 {offsets = [0, 256], sizes = [8, 128], strides = [1, 1]} : vector<8x512xf32> to vector<8x128xf32>
    %162 = math.tanh %161 : vector<8x128xf32>
    %163 = vector.extract_strided_slice %148 {offsets = [0, 384], sizes = [8, 128], strides = [1, 1]} : vector<8x512xf32> to vector<8x128xf32>
    %164 = arith.negf %163 : vector<8x128xf32>
    %165 = math.exp %164 : vector<8x128xf32>
    %cst_47 = arith.constant 1.000000e+00 : f32
    %166 = vector.broadcast %cst_47 : f32 to vector<8x128xf32>
    %167 = arith.addf %166, %165 : vector<8x128xf32>
    %168 = arith.divf %166, %167 : vector<8x128xf32>
    %169 = arith.mulf %160, %138 : vector<8x128xf32>
    %170 = arith.mulf %154, %162 : vector<8x128xf32>
    %171 = arith.addf %169, %170 : vector<8x128xf32>
    %172 = math.tanh %171 : vector<8x128xf32>
    %173 = arith.mulf %168, %172 : vector<8x128xf32>
    %c5_i32 = arith.constant 5 : i32
    %c8_i32_48 = arith.constant 8 : i32
    %174 = arith.muli %c5_i32, %c8_i32_48 : i32
    %175 = tpu.assume_multiple %174, 8 : i32
    %176 = arith.index_cast %175 : i32 to index
    %c0_49 = arith.constant 0 : index
    %177 = vector.load %arg9[%176, %c0_49] : memref<64x512xf32, #tpu.memory_space<vmem>>, vector<8x512xf32>
    %178 = arith.truncf %173 : vector<8x128xf32> to vector<8x128xbf16>
    %c0_50 = arith.constant 0 : index
    %c0_51 = arith.constant 0 : index
    %179 = vector.load %arg3[%c0_50, %c0_51] : memref<128x512xbf16, #tpu.memory_space<vmem>>, vector<128x512xbf16>
    %cst_52 = arith.constant dense<0.000000e+00> : vector<8x512xf32>
    %180 = tpu.matmul %178, %179, %cst_52 {dimension_numbers = #tpu.dot_dimension_numbers<[1], [0], [0], [1], [0, 0, 1, 1], [], []>} : vector<8x128xbf16>, vector<128x512xbf16>, vector<8x512xf32> -> vector<8x512xf32>
    %181 = arith.addf %177, %180 : vector<8x512xf32>
    %182 = vector.extract_strided_slice %181 {offsets = [0, 0], sizes = [8, 128], strides = [1, 1]} : vector<8x512xf32> to vector<8x128xf32>
    %183 = arith.negf %182 : vector<8x128xf32>
    %184 = math.exp %183 : vector<8x128xf32>
    %cst_53 = arith.constant 1.000000e+00 : f32
    %185 = vector.broadcast %cst_53 : f32 to vector<8x128xf32>
    %186 = arith.addf %185, %184 : vector<8x128xf32>
    %187 = arith.divf %185, %186 : vector<8x128xf32>
    %188 = vector.extract_strided_slice %181 {offsets = [0, 128], sizes = [8, 128], strides = [1, 1]} : vector<8x512xf32> to vector<8x128xf32>
    %189 = arith.negf %188 : vector<8x128xf32>
    %190 = math.exp %189 : vector<8x128xf32>
    %cst_54 = arith.constant 1.000000e+00 : f32
    %191 = vector.broadcast %cst_54 : f32 to vector<8x128xf32>
    %192 = arith.addf %191, %190 : vector<8x128xf32>
    %193 = arith.divf %191, %192 : vector<8x128xf32>
    %194 = vector.extract_strided_slice %181 {offsets = [0, 256], sizes = [8, 128], strides = [1, 1]} : vector<8x512xf32> to vector<8x128xf32>
    %195 = math.tanh %194 : vector<8x128xf32>
    %196 = vector.extract_strided_slice %181 {offsets = [0, 384], sizes = [8, 128], strides = [1, 1]} : vector<8x512xf32> to vector<8x128xf32>
    %197 = arith.negf %196 : vector<8x128xf32>
    %198 = math.exp %197 : vector<8x128xf32>
    %cst_55 = arith.constant 1.000000e+00 : f32
    %199 = vector.broadcast %cst_55 : f32 to vector<8x128xf32>
    %200 = arith.addf %199, %198 : vector<8x128xf32>
    %201 = arith.divf %199, %200 : vector<8x128xf32>
    %202 = arith.mulf %193, %171 : vector<8x128xf32>
    %203 = arith.mulf %187, %195 : vector<8x128xf32>
    %204 = arith.addf %202, %203 : vector<8x128xf32>
    %205 = math.tanh %204 : vector<8x128xf32>
    %206 = arith.mulf %201, %205 : vector<8x128xf32>
    %c6_i32 = arith.constant 6 : i32
    %c8_i32_56 = arith.constant 8 : i32
    %207 = arith.muli %c6_i32, %c8_i32_56 : i32
    %208 = tpu.assume_multiple %207, 8 : i32
    %209 = arith.index_cast %208 : i32 to index
    %c0_57 = arith.constant 0 : index
    %210 = vector.load %arg9[%209, %c0_57] : memref<64x512xf32, #tpu.memory_space<vmem>>, vector<8x512xf32>
    %211 = arith.truncf %206 : vector<8x128xf32> to vector<8x128xbf16>
    %c0_58 = arith.constant 0 : index
    %c0_59 = arith.constant 0 : index
    %212 = vector.load %arg3[%c0_58, %c0_59] : memref<128x512xbf16, #tpu.memory_space<vmem>>, vector<128x512xbf16>
    %cst_60 = arith.constant dense<0.000000e+00> : vector<8x512xf32>
    %213 = tpu.matmul %211, %212, %cst_60 {dimension_numbers = #tpu.dot_dimension_numbers<[1], [0], [0], [1], [0, 0, 1, 1], [], []>} : vector<8x128xbf16>, vector<128x512xbf16>, vector<8x512xf32> -> vector<8x512xf32>
    %214 = arith.addf %210, %213 : vector<8x512xf32>
    %215 = vector.extract_strided_slice %214 {offsets = [0, 0], sizes = [8, 128], strides = [1, 1]} : vector<8x512xf32> to vector<8x128xf32>
    %216 = arith.negf %215 : vector<8x128xf32>
    %217 = math.exp %216 : vector<8x128xf32>
    %cst_61 = arith.constant 1.000000e+00 : f32
    %218 = vector.broadcast %cst_61 : f32 to vector<8x128xf32>
    %219 = arith.addf %218, %217 : vector<8x128xf32>
    %220 = arith.divf %218, %219 : vector<8x128xf32>
    %221 = vector.extract_strided_slice %214 {offsets = [0, 128], sizes = [8, 128], strides = [1, 1]} : vector<8x512xf32> to vector<8x128xf32>
    %222 = arith.negf %221 : vector<8x128xf32>
    %223 = math.exp %222 : vector<8x128xf32>
    %cst_62 = arith.constant 1.000000e+00 : f32
    %224 = vector.broadcast %cst_62 : f32 to vector<8x128xf32>
    %225 = arith.addf %224, %223 : vector<8x128xf32>
    %226 = arith.divf %224, %225 : vector<8x128xf32>
    %227 = vector.extract_strided_slice %214 {offsets = [0, 256], sizes = [8, 128], strides = [1, 1]} : vector<8x512xf32> to vector<8x128xf32>
    %228 = math.tanh %227 : vector<8x128xf32>
    %229 = vector.extract_strided_slice %214 {offsets = [0, 384], sizes = [8, 128], strides = [1, 1]} : vector<8x512xf32> to vector<8x128xf32>
    %230 = arith.negf %229 : vector<8x128xf32>
    %231 = math.exp %230 : vector<8x128xf32>
    %cst_63 = arith.constant 1.000000e+00 : f32
    %232 = vector.broadcast %cst_63 : f32 to vector<8x128xf32>
    %233 = arith.addf %232, %231 : vector<8x128xf32>
    %234 = arith.divf %232, %233 : vector<8x128xf32>
    %235 = arith.mulf %226, %204 : vector<8x128xf32>
    %236 = arith.mulf %220, %228 : vector<8x128xf32>
    %237 = arith.addf %235, %236 : vector<8x128xf32>
    %238 = math.tanh %237 : vector<8x128xf32>
    %239 = arith.mulf %234, %238 : vector<8x128xf32>
    %c7_i32 = arith.constant 7 : i32
    %c8_i32_64 = arith.constant 8 : i32
    %240 = arith.muli %c7_i32, %c8_i32_64 : i32
    %241 = tpu.assume_multiple %240, 8 : i32
    %242 = arith.index_cast %241 : i32 to index
    %c0_65 = arith.constant 0 : index
    %243 = vector.load %arg9[%242, %c0_65] : memref<64x512xf32, #tpu.memory_space<vmem>>, vector<8x512xf32>
    %244 = arith.truncf %239 : vector<8x128xf32> to vector<8x128xbf16>
    %c0_66 = arith.constant 0 : index
    %c0_67 = arith.constant 0 : index
    %245 = vector.load %arg3[%c0_66, %c0_67] : memref<128x512xbf16, #tpu.memory_space<vmem>>, vector<128x512xbf16>
    %cst_68 = arith.constant dense<0.000000e+00> : vector<8x512xf32>
    %246 = tpu.matmul %244, %245, %cst_68 {dimension_numbers = #tpu.dot_dimension_numbers<[1], [0], [0], [1], [0, 0, 1, 1], [], []>} : vector<8x128xbf16>, vector<128x512xbf16>, vector<8x512xf32> -> vector<8x512xf32>
    %247 = arith.addf %243, %246 : vector<8x512xf32>
    %248 = vector.extract_strided_slice %247 {offsets = [0, 0], sizes = [8, 128], strides = [1, 1]} : vector<8x512xf32> to vector<8x128xf32>
    %249 = arith.negf %248 : vector<8x128xf32>
    %250 = math.exp %249 : vector<8x128xf32>
    %cst_69 = arith.constant 1.000000e+00 : f32
    %251 = vector.broadcast %cst_69 : f32 to vector<8x128xf32>
    %252 = arith.addf %251, %250 : vector<8x128xf32>
    %253 = arith.divf %251, %252 : vector<8x128xf32>
    %254 = vector.extract_strided_slice %247 {offsets = [0, 128], sizes = [8, 128], strides = [1, 1]} : vector<8x512xf32> to vector<8x128xf32>
    %255 = arith.negf %254 : vector<8x128xf32>
    %256 = math.exp %255 : vector<8x128xf32>
    %cst_70 = arith.constant 1.000000e+00 : f32
    %257 = vector.broadcast %cst_70 : f32 to vector<8x128xf32>
    %258 = arith.addf %257, %256 : vector<8x128xf32>
    %259 = arith.divf %257, %258 : vector<8x128xf32>
    %260 = vector.extract_strided_slice %247 {offsets = [0, 256], sizes = [8, 128], strides = [1, 1]} : vector<8x512xf32> to vector<8x128xf32>
    %261 = math.tanh %260 : vector<8x128xf32>
    %262 = vector.extract_strided_slice %247 {offsets = [0, 384], sizes = [8, 128], strides = [1, 1]} : vector<8x512xf32> to vector<8x128xf32>
    %263 = arith.negf %262 : vector<8x128xf32>
    %264 = math.exp %263 : vector<8x128xf32>
    %cst_71 = arith.constant 1.000000e+00 : f32
    %265 = vector.broadcast %cst_71 : f32 to vector<8x128xf32>
    %266 = arith.addf %265, %264 : vector<8x128xf32>
    %267 = arith.divf %265, %266 : vector<8x128xf32>
    %268 = arith.mulf %259, %237 : vector<8x128xf32>
    %269 = arith.mulf %253, %261 : vector<8x128xf32>
    %270 = arith.addf %268, %269 : vector<8x128xf32>
    %271 = math.tanh %270 : vector<8x128xf32>
    %272 = arith.mulf %267, %271 : vector<8x128xf32>
    %c8_i32_72 = arith.constant 8 : i32
    %c0_73 = arith.constant 0 : index
    %c0_74 = arith.constant 0 : index
    %273 = vector.load %arg7[%c0_73, %c0_74] : memref<8x512xf32, #tpu.memory_space<vmem>>, vector<1x128xf32>
    %274 = arith.truncf %272 : vector<8x128xf32> to vector<8x128xbf16>
    %c0_75 = arith.constant 0 : index
    %c0_76 = arith.constant 0 : index
    %275 = vector.load %arg4[%c0_75, %c0_76] : memref<128x128xbf16, #tpu.memory_space<vmem>>, vector<128x128xbf16>
    %cst_77 = arith.constant dense<0.000000e+00> : vector<8x128xf32>
    %276 = tpu.matmul %274, %275, %cst_77 {dimension_numbers = #tpu.dot_dimension_numbers<[1], [0], [0], [1], [0, 0, 1, 1], [], []>} : vector<8x128xbf16>, vector<128x128xbf16>, vector<8x128xf32> -> vector<8x128xf32>
    %277 = vector.broadcast %273 : vector<1x128xf32> to vector<8x128xf32>
    %278 = arith.addf %276, %277 : vector<8x128xf32>
    %cst_78 = arith.constant 0.000000e+00 : f32
    %279 = vector.broadcast %cst_78 : f32 to vector<8x128xf32>
    %280 = arith.maximumf %278, %279 : vector<8x128xf32>
    %c1 = arith.constant 1 : index
    %c0_79 = arith.constant 0 : index
    %281 = vector.load %arg7[%c1, %c0_79] : memref<8x512xf32, #tpu.memory_space<vmem>>, vector<1x512xf32>
    %282 = arith.truncf %280 : vector<8x128xf32> to vector<8x128xbf16>
    %c0_80 = arith.constant 0 : index
    %c0_81 = arith.constant 0 : index
    %283 = vector.load %arg5[%c0_80, %c0_81] : memref<128x512xbf16, #tpu.memory_space<vmem>>, vector<128x512xbf16>
    %cst_82 = arith.constant dense<0.000000e+00> : vector<8x512xf32>
    %284 = tpu.matmul %282, %283, %cst_82 {dimension_numbers = #tpu.dot_dimension_numbers<[1], [0], [0], [1], [0, 0, 1, 1], [], []>} : vector<8x128xbf16>, vector<128x512xbf16>, vector<8x512xf32> -> vector<8x512xf32>
    %285 = vector.broadcast %281 : vector<1x512xf32> to vector<8x512xf32>
    %286 = arith.addf %284, %285 : vector<8x512xf32>
    %cst_83 = arith.constant 0.000000e+00 : f32
    %287 = vector.broadcast %cst_83 : f32 to vector<8x512xf32>
    %288 = arith.maximumf %286, %287 : vector<8x512xf32>
    %c2 = arith.constant 2 : index
    %c0_84 = arith.constant 0 : index
    %289 = vector.load %arg7[%c2, %c0_84] : memref<8x512xf32, #tpu.memory_space<vmem>>, vector<1x128xf32>
    %290 = arith.truncf %288 : vector<8x512xf32> to vector<8x512xbf16>
    %c0_85 = arith.constant 0 : index
    %c0_86 = arith.constant 0 : index
    %291 = vector.load %arg6[%c0_85, %c0_86] : memref<512x128xbf16, #tpu.memory_space<vmem>>, vector<512x128xbf16>
    %cst_87 = arith.constant dense<0.000000e+00> : vector<8x128xf32>
    %292 = tpu.matmul %290, %291, %cst_87 {dimension_numbers = #tpu.dot_dimension_numbers<[1], [0], [0], [1], [0, 0, 1, 1], [], []>} : vector<8x512xbf16>, vector<512x128xbf16>, vector<8x128xf32> -> vector<8x128xf32>
    %293 = vector.broadcast %289 : vector<1x128xf32> to vector<8x128xf32>
    %294 = arith.addf %292, %293 : vector<8x128xf32>
    %c0_88 = arith.constant 0 : index
    %c0_89 = arith.constant 0 : index
    %295 = vector.load %arg8[%c0_88, %c0_89] : memref<8x128xf32, #tpu.memory_space<vmem>>, vector<8x128xf32>
    tpu.vector_store %arg8[%c0_88, %c0_89], %294 {strides = array<i32>} : memref<8x128xf32, #tpu.memory_space<vmem>>, vector<8x128xf32>,
    return
  }
}

</mosaic_0001>

<llo_original>
// kernel: performance_predictor_forward.1
$region0: #{performance_predictor_forward.1}
  #allocation0 [shape = 'u32[]', space=smem, size = 0x4, offset = 0x4, fixed_abs, tag = 'smem constant byte address 0x4 - core index']
  #allocation1 [shape = 'u32[72,128]{1,0:T(1,128)}', space=vmem, size = 0x9000, scoped, tag = 'internal scratch']
  #allocation2 [shape = 'f32[64,512]{1,0:T(8,128)}', space=vmem, size = 0x20000, scoped, tag = 'scratch operand']
  %s0 = inlined_call_operand.vmem [shape: f32[64,16], index: 0, kind: input, shape index: {}]
  %s1 = inlined_call_operand.vmem [shape: f32[64,512], index: 1, kind: input, shape index: {}]
  %s2 = inlined_call_operand.vmem [shape: bf16[16,512], index: 2, kind: input, shape index: {}]
  %s3 = inlined_call_operand.hbm [shape: bf16[128,512], index: 3, kind: input, shape index: {}]
  %s4 = inlined_call_operand.vmem [shape: bf16[128,128], index: 4, kind: input, shape index: {}]
  %s5 = inlined_call_operand.hbm [shape: bf16[128,512], index: 5, kind: input, shape index: {}]
  %s6 = inlined_call_operand.hbm [shape: bf16[512,128], index: 6, kind: input, shape index: {}]
  %s7 = inlined_call_operand.vmem [shape: f32[8,512], index: 7, kind: input, shape index: {}]
  %s8 = inlined_call_operand.vmem [shape: f32[8,128], index: 8, kind: output, shape index: {}]
  %s9 = sld [smem:[#allocation0]]
  $region54: #{performance_predictor_forward.1} parent=0
    _
  %s11 = ssub.s32 1, %s9
  %s12 = scalar_select 0, %s11, %s9
  $region1: #{performance_predictor_forward.1} parent=0
    #allocation3 [shape = 'u8[131072]{0}', space=vmem, size = 0x20000, scoped, tag = 'input window, operand 3, single buffered']
    #allocation4 [shape = 's32[1]{0}', space=sflag, size = 0x4, scoped, tag = 'scoped memory for performance_predictor_forward.1']
    #allocation5 [shape = 'u8[131072]{0}', space=vmem, size = 0x20000, scoped, tag = 'input window, operand 5, single buffered']
    #allocation6 [shape = 's32[1]{0}', space=sflag, size = 0x4, scoped, tag = 'scoped memory for performance_predictor_forward.1']
    #allocation7 [shape = 'u8[131072]{0}', space=vmem, size = 0x20000, scoped, tag = 'input window, operand 6, single buffered']
    %13 = vsyncpa [#allocation4], 0
    %14 = vsyncpa [#allocation6], 0
    // Predicated region
    $region2: #{performance_predictor_forward.1} parent=1 // pred_check
      _
    $region3: #{performance_predictor_forward.1} parent=1 // pred_check_branch
      %16 = sbr.rel (0) target = $region5
    $region4: #{performance_predictor_forward.1} parent=1 // pred_region
      _
    $region5: #{performance_predictor_forward.1} parent=1 // pred_fallthru
      _
    // Predicated region
    $region6: #{performance_predictor_forward.1} parent=1 // pred_check
      _
    $region7: #{performance_predictor_forward.1} parent=1 // pred_check_branch
      %18 = sbr.rel (0) target = $region9
    $region8: #{performance_predictor_forward.1} parent=1 // pred_region
      _
    $region9: #{performance_predictor_forward.1} parent=1 // pred_fallthru
      _
    // Predicated region
    $region10: #{performance_predictor_forward.1} parent=1 // pred_check
      _
    $region11: #{performance_predictor_forward.1} parent=1 // pred_check_branch
      %20 = sbr.rel (0) target = $region13
    $region12: #{performance_predictor_forward.1} parent=1 // pred_region
      _
    $region13: #{performance_predictor_forward.1} parent=1 // pred_fallthru
      _
    // Predicated region
    $region14: #{performance_predictor_forward.1} parent=1 // pred_check
      _
    $region15: #{performance_predictor_forward.1} parent=1 // pred_check_branch
      %22 = sbr.rel (0) target = $region17
    $region16: #{performance_predictor_forward.1} parent=1 // pred_region
      %24 = vsyncadd [#allocation4], 0
      %s25 = sshll.u32 %s3, 4
      %s26 = int_to_ptr.hbm [resolvable:$true] %s25
      %s27 = sshll.u32 [#allocation3], 4
      %s28 = int_to_ptr.vmem [resolvable:$true] %s27
      %33 = dma.hbm_to_vmem [thread:$0]  %s26, 4096, %s28, [#allocation4], 256, 256, 16
    $region17: #{performance_predictor_forward.1} parent=1 // pred_fallthru
      _
    // Predicated region
    $region18: #{performance_predictor_forward.1} parent=1 // pred_check
      _
    $region19: #{performance_predictor_forward.1} parent=1 // pred_check_branch
      %35 = sbr.rel (0) target = $region21
    $region20: #{performance_predictor_forward.1} parent=1 // pred_region
      _
    $region21: #{performance_predictor_forward.1} parent=1 // pred_fallthru
      _
    // Predicated region
    $region22: #{performance_predictor_forward.1} parent=1 // pred_check
      _
    $region23: #{performance_predictor_forward.1} parent=1 // pred_check_branch
      %37 = sbr.rel (0) target = $region25
    $region24: #{performance_predictor_forward.1} parent=1 // pred_region
      %39 = vsyncadd [#allocation6], 0
      %s40 = sshll.u32 %s5, 4
      %s41 = int_to_ptr.hbm [resolvable:$true] %s40
      %s42 = sshll.u32 [#allocation5], 4
      %s43 = int_to_ptr.vmem [resolvable:$true] %s42
      %48 = dma.hbm_to_vmem [thread:$0]  %s41, 4096, %s43, [#allocation6], 256, 256, 16
    $region25: #{performance_predictor_forward.1} parent=1 // pred_fallthru
      _
    // Predicated region
    $region26: #{performance_predictor_forward.1} parent=1 // pred_check
      _
    $region27: #{performance_predictor_forward.1} parent=1 // pred_check_branch
      %50 = sbr.rel (0) target = $region29
    $region28: #{performance_predictor_forward.1} parent=1 // pred_region
      %52 = vsyncadd [#allocation6], 0
      %s53 = sshll.u32 %s6, 4
      %s54 = int_to_ptr.hbm [resolvable:$true] %s53
      %s55 = sshll.u32 [#allocation7], 4
      %s56 = int_to_ptr.vmem [resolvable:$true] %s55
      %61 = dma.hbm_to_vmem [thread:$0]  %s54, 4096, %s56, [#allocation6], 64, 64, 4
    $region29: #{performance_predictor_forward.1} parent=1 // pred_fallthru
      _
    // Predicated region
    $region30: #{performance_predictor_forward.1} parent=1 // pred_check
      _
    $region31: #{performance_predictor_forward.1} parent=1 // pred_check_branch
      %63 = sbr.rel (0) target = $region33
    $region32: #{performance_predictor_forward.1} parent=1 // pred_region
      _
    $region33: #{performance_predictor_forward.1} parent=1 // pred_fallthru
      _
    // Predicated region
    $region34: #{performance_predictor_forward.1} parent=1 // pred_check
      _
    $region35: #{performance_predictor_forward.1} parent=1 // pred_check_branch
      %65 = sbr.rel (0) target = $region37
    $region36: #{performance_predictor_forward.1} parent=1 // pred_region
      %67 = dma.done [#allocation4], 4096
    $region37: #{performance_predictor_forward.1} parent=1 // pred_fallthru
      _
    // Predicated region
    $region38: #{performance_predictor_forward.1} parent=1 // pred_check
      _
    $region39: #{performance_predictor_forward.1} parent=1 // pred_check_branch
      %69 = sbr.rel (0) target = $region41
    $region40: #{performance_predictor_forward.1} parent=1 // pred_region
      %71 = dma.done [#allocation6], 4096
    $region41: #{performance_predictor_forward.1} parent=1 // pred_fallthru
      _
    // Predicated region
    $region42: #{performance_predictor_forward.1} parent=1 // pred_check
      _
    $region43: #{performance_predictor_forward.1} parent=1 // pred_check_branch
      %73 = sbr.rel (0) target = $region45
    $region44: #{performance_predictor_forward.1} parent=1 // pred_region
      %75 = dma.done [#allocation6], 4096
    $region45: #{performance_predictor_forward.1} parent=1 // pred_fallthru
      _
    %v77 = vld [vmem:[%s0] sm:$0xff]
    %v78 = vld [vmem:[%s0 + $0x8] sm:$0xff]
    %v79 = vld [vmem:[%s0 + $0x10] sm:$0xff]
    %v80 = vld [vmem:[%s0 + $0x18] sm:$0xff]
    %v81 = vld [vmem:[%s0 + $0x20] sm:$0xff]
    %v82 = vld [vmem:[%s0 + $0x28] sm:$0xff]
    %v83 = vld [vmem:[%s0 + $0x30] sm:$0xff]
    %v84 = vld [vmem:[%s0 + $0x38] sm:$0xff]
    %v85 = vpack.c.bf16 %v78, %v77
    %v86 = vpack.c.bf16 %v80, %v79
    %v87 = vpack.c.bf16 %v82, %v81
    %v88 = vpack.c.bf16 %v84, %v83
    %v89 = vld [vmem:[%s2] sm:$0xff]
    %v90 = vld [vmem:[%s2 + $0x8] sm:$0xff]
    %v91 = vld [vmem:[%s2 + $0x10] sm:$0xff]
    %v92 = vld [vmem:[%s2 + $0x18] sm:$0xff]
    %v93 = vld [vmem:[%s1] sm:$0xff]
    %v94 = vld [vmem:[%s1 + $0x8] sm:$0xff]
    %v95 = vld [vmem:[%s1 + $0x10] sm:$0xff]
    %v96 = vld [vmem:[%s1 + $0x18] sm:$0xff]
    %v97 = vld [vmem:[%s1 + $0x20] sm:$0xff]
    %v98 = vld [vmem:[%s1 + $0x28] sm:$0xff]
    %v99 = vld [vmem:[%s1 + $0x30] sm:$0xff]
    %v100 = vld [vmem:[%s1 + $0x38] sm:$0xff]
    %v101 = vld [vmem:[%s1 + $0x40] sm:$0xff]
    %v102 = vld [vmem:[%s1 + $0x48] sm:$0xff]
    %v103 = vld [vmem:[%s1 + $0x50] sm:$0xff]
    %v104 = vld [vmem:[%s1 + $0x58] sm:$0xff]
    %v105 = vld [vmem:[%s1 + $0x60] sm:$0xff]
    %v106 = vld [vmem:[%s1 + $0x68] sm:$0xff]
    %v107 = vld [vmem:[%s1 + $0x70] sm:$0xff]
    %v108 = vld [vmem:[%s1 + $0x78] sm:$0xff]
    %v109 = vld [vmem:[%s1 + $0x80] sm:$0xff]
    %v110 = vld [vmem:[%s1 + $0x88] sm:$0xff]
    %v111 = vld [vmem:[%s1 + $0x90] sm:$0xff]
    %v112 = vld [vmem:[%s1 + $0x98] sm:$0xff]
    %v113 = vld [vmem:[%s1 + $0xa0] sm:$0xff]
    %v114 = vld [vmem:[%s1 + $0xa8] sm:$0xff]
    %v115 = vld [vmem:[%s1 + $0xb0] sm:$0xff]
    %v116 = vld [vmem:[%s1 + $0xb8] sm:$0xff]
    %v117 = vld [vmem:[%s1 + $0xc0] sm:$0xff]
    %v118 = vld [vmem:[%s1 + $0xc8] sm:$0xff]
    %v119 = vld [vmem:[%s1 + $0xd0] sm:$0xff]
    %v120 = vld [vmem:[%s1 + $0xd8] sm:$0xff]
    %v121 = vld [vmem:[%s1 + $0xe0] sm:$0xff]
    %v122 = vld [vmem:[%s1 + $0xe8] sm:$0xff]
    %v123 = vld [vmem:[%s1 + $0xf0] sm:$0xff]
    %v124 = vld [vmem:[%s1 + $0xf8] sm:$0xff]
    %v129 = vunpack.c.l.b16 %v89
    %v130 = vunpack.c.h.b16 %v89
    %v131 = vunpack.c.l.b16 %v90
    %v132 = vunpack.c.h.b16 %v90
    %v133 = vunpack.c.l.b16 %v91
    %v134 = vunpack.c.h.b16 %v91
    %v135 = vunpack.c.l.b16 %v92
    %v136 = vunpack.c.h.b16 %v92
    %v137 = vpack.c.b16 %v133, %v129
    %v138 = vpack.c.b16 %v134, %v130
    %v139 = vpack.c.b16 %v135, %v131
    %v140 = vpack.c.b16 %v136, %v132
    %vm145 = vcmask 130048
    %v147 = vsel %vm145, %v85, 0
    %v150 = vsel %vm145, %v86, 0
    %v153 = vsel %vm145, %v87, 0
    %v156 = vsel %vm145, %v88, 0
    %158 = vmatpush.bf16.msra.mxu0 0
    %159 = vmatpush.bf16.msra.mxu0 0
    %160 = vmatpush.bf16.msra.mxu0 0
    %161 = vmatpush.bf16.msra.mxu0 0
    %162 = vmatpush.bf16.msra.mxu0 0
    %163 = vmatpush.bf16.msra.mxu0 0
    %164 = vmatpush.bf16.msra.mxu0 0
    %165 = vmatpush.bf16.msra.mxu0 %v137
    %166 = vmatmul.bf16.gmra.mxu0 %v147
    %v167 = vpop.f32.mrf.mxu0
    %v168 = vadd.f32 %v93, %v167
    %v169 = vpop.f32.mrf.mxu0
    %v170 = vadd.f32 %v97, %v169
    %171 = vmatmul.bf16.gmra.mxu0 %v150
    %v172 = vpop.f32.mrf.mxu0
    %v173 = vadd.f32 %v101, %v172
    %v174 = vpop.f32.mrf.mxu0
    %v175 = vadd.f32 %v105, %v174
    %176 = vmatmul.bf16.gmra.mxu0 %v153
    %v177 = vpop.f32.mrf.mxu0
    %v178 = vadd.f32 %v109, %v177
    %v179 = vpop.f32.mrf.mxu0
    %v180 = vadd.f32 %v113, %v179
    %181 = vmatmul.bf16.gmra.mxu0 %v156
    %v182 = vpop.f32.mrf.mxu0
    %v183 = vadd.f32 %v117, %v182
    %v184 = vpop.f32.mrf.mxu0
    %v185 = vadd.f32 %v121, %v184
    %186 = vdwg.mxu0
    %187 = vmatpush.bf16.msra.mxu0 0
    %188 = vmatpush.bf16.msra.mxu0 0
    %189 = vmatpush.bf16.msra.mxu0 0
    %190 = vmatpush.bf16.msra.mxu0 0
    %191 = vmatpush.bf16.msra.mxu0 0
    %192 = vmatpush.bf16.msra.mxu0 0
    %193 = vmatpush.bf16.msra.mxu0 0
    %194 = vmatpush.bf16.msra.mxu0 %v138
    %195 = vmatmul.bf16.gmra.mxu0 %v147
    %v196 = vpop.f32.mrf.mxu0
    %v197 = vadd.f32 %v94, %v196
    %v198 = vpop.f32.mrf.mxu0
    %v199 = vadd.f32 %v98, %v198
    %200 = vmatmul.bf16.gmra.mxu0 %v150
    %v201 = vpop.f32.mrf.mxu0
    %v202 = vadd.f32 %v102, %v201
    %v203 = vpop.f32.mrf.mxu0
    %v204 = vadd.f32 %v106, %v203
    %205 = vmatmul.bf16.gmra.mxu0 %v153
    %v206 = vpop.f32.mrf.mxu0
    %v207 = vadd.f32 %v110, %v206
    %v208 = vpop.f32.mrf.mxu0
    %v209 = vadd.f32 %v114, %v208
    %210 = vmatmul.bf16.gmra.mxu0 %v156
    %v211 = vpop.f32.mrf.mxu0
    %v212 = vadd.f32 %v118, %v211
    %v213 = vpop.f32.mrf.mxu0
    %v214 = vadd.f32 %v122, %v213
    %215 = vdwg.mxu0
    %216 = vmatpush.bf16.msra.mxu0 0
    %217 = vmatpush.bf16.msra.mxu0 0
    %218 = vmatpush.bf16.msra.mxu0 0
    %219 = vmatpush.bf16.msra.mxu0 0
    %220 = vmatpush.bf16.msra.mxu0 0
    %221 = vmatpush.bf16.msra.mxu0 0
    %222 = vmatpush.bf16.msra.mxu0 0
    %223 = vmatpush.bf16.msra.mxu0 %v139
    %224 = vmatmul.bf16.gmra.mxu0 %v147
    %v225 = vpop.f32.mrf.mxu0
    %v226 = vadd.f32 %v95, %v225
    %v227 = vpop.f32.mrf.mxu0
    %v228 = vadd.f32 %v99, %v227
    %229 = vmatmul.bf16.gmra.mxu0 %v150
    %v230 = vpop.f32.mrf.mxu0
    %v231 = vadd.f32 %v103, %v230
    %v232 = vpop.f32.mrf.mxu0
    %v233 = vadd.f32 %v107, %v232
    %234 = vmatmul.bf16.gmra.mxu0 %v153
    %v235 = vpop.f32.mrf.mxu0
    %v236 = vadd.f32 %v111, %v235
    %v237 = vpop.f32.mrf.mxu0
    %v238 = vadd.f32 %v115, %v237
    %239 = vmatmul.bf16.gmra.mxu0 %v156
    %v240 = vpop.f32.mrf.mxu0
    %v241 = vadd.f32 %v119, %v240
    %v242 = vpop.f32.mrf.mxu0
    %v243 = vadd.f32 %v123, %v242
    %244 = vdwg.mxu0
    %245 = vmatpush.bf16.msra.mxu0 0
    %246 = vmatpush.bf16.msra.mxu0 0
    %247 = vmatpush.bf16.msra.mxu0 0
    %248 = vmatpush.bf16.msra.mxu0 0
    %249 = vmatpush.bf16.msra.mxu0 0
    %250 = vmatpush.bf16.msra.mxu0 0
    %251 = vmatpush.bf16.msra.mxu0 0
    %252 = vmatpush.bf16.msra.mxu0 %v140
    %253 = vmatmul.bf16.gmra.mxu0 %v147
    %v254 = vpop.f32.mrf.mxu0
    %v255 = vadd.f32 %v96, %v254
    %v256 = vpop.f32.mrf.mxu0
    %v257 = vadd.f32 %v100, %v256
    %258 = vmatmul.bf16.gmra.mxu0 %v150
    %v259 = vpop.f32.mrf.mxu0
    %v260 = vadd.f32 %v104, %v259
    %v261 = vpop.f32.mrf.mxu0
    %v262 = vadd.f32 %v108, %v261
    %263 = vmatmul.bf16.gmra.mxu0 %v153
    %v264 = vpop.f32.mrf.mxu0
    %v265 = vadd.f32 %v112, %v264
    %v266 = vpop.f32.mrf.mxu0
    %v267 = vadd.f32 %v116, %v266
    %268 = vmatmul.bf16.gmra.mxu0 %v156
    %v269 = vpop.f32.mrf.mxu0
    %v270 = vadd.f32 %v120, %v269
    %v271 = vpop.f32.mrf.mxu0
    %v272 = vadd.f32 %v124, %v271
    %273 = vdwg.mxu0
    %274 = vst [vmem:[#allocation2] sm:$0xff] %v168
    %275 = vst [vmem:[#allocation2 + $0x8] sm:$0xff] %v197
    %276 = vst [vmem:[#allocation2 + $0x10] sm:$0xff] %v226
    %277 = vst [vmem:[#allocation2 + $0x18] sm:$0xff] %v255
    %278 = vst [vmem:[#allocation2 + $0x20] sm:$0xff] %v170
    %279 = vst [vmem:[#allocation2 + $0x28] sm:$0xff] %v199
    %280 = vst [vmem:[#allocation2 + $0x30] sm:$0xff] %v228
    %281 = vst [vmem:[#allocation2 + $0x38] sm:$0xff] %v257
    %282 = vst [vmem:[#allocation2 + $0x40] sm:$0xff] %v173
    %283 = vst [vmem:[#allocation2 + $0x48] sm:$0xff] %v202
    %284 = vst [vmem:[#allocation2 + $0x50] sm:$0xff] %v231
    %285 = vst [vmem:[#allocation2 + $0x58] sm:$0xff] %v260
    %286 = vst [vmem:[#allocation2 + $0x60] sm:$0xff] %v175
    %287 = vst [vmem:[#allocation2 + $0x68] sm:$0xff] %v204
    %288 = vst [vmem:[#allocation2 + $0x70] sm:$0xff] %v233
    %289 = vst [vmem:[#allocation2 + $0x78] sm:$0xff] %v262
    %290 = vst [vmem:[#allocation2 + $0x80] sm:$0xff] %v178
    %291 = vst [vmem:[#allocation2 + $0x88] sm:$0xff] %v207
    %292 = vst [vmem:[#allocation2 + $0x90] sm:$0xff] %v236
    %293 = vst [vmem:[#allocation2 + $0x98] sm:$0xff] %v265
    %294 = vst [vmem:[#allocation2 + $0xa0] sm:$0xff] %v180
    %295 = vst [vmem:[#allocation2 + $0xa8] sm:$0xff] %v209
    %296 = vst [vmem:[#allocation2 + $0xb0] sm:$0xff] %v238
    %297 = vst [vmem:[#allocation2 + $0xb8] sm:$0xff] %v267
    %298 = vst [vmem:[#allocation2 + $0xc0] sm:$0xff] %v183
    %299 = vst [vmem:[#allocation2 + $0xc8] sm:$0xff] %v212
    %300 = vst [vmem:[#allocation2 + $0xd0] sm:$0xff] %v241
    %301 = vst [vmem:[#allocation2 + $0xd8] sm:$0xff] %v270
    %302 = vst [vmem:[#allocation2 + $0xe0] sm:$0xff] %v185
    %303 = vst [vmem:[#allocation2 + $0xe8] sm:$0xff] %v214
    %304 = vst [vmem:[#allocation2 + $0xf0] sm:$0xff] %v243
    %305 = vst [vmem:[#allocation2 + $0xf8] sm:$0xff] %v272
    %s306 = smul.u32 0, 4
    %s307 = smul.addr %s306, 8
    %s308 = scalar_lea.vmem [#allocation2], %s307
    %v309 = vld [vmem:[%s308] sm:$0xff]
    %v310 = vld [vmem:[%s308 + $0x8] sm:$0xff]
    %v311 = vld [vmem:[%s308 + $0x10] sm:$0xff]
    %v312 = vld [vmem:[%s308 + $0x18] sm:$0xff]
    %v313 = vld [vmem:[#allocation3] sm:$0xff]
    %v314 = vld [vmem:[#allocation3 + $0x8] sm:$0xff]
    %v315 = vld [vmem:[#allocation3 + $0x10] sm:$0xff]
    %v316 = vld [vmem:[#allocation3 + $0x18] sm:$0xff]
    %v317 = vld [vmem:[#allocation3 + $0x20] sm:$0xff]
    %v318 = vld [vmem:[#allocation3 + $0x28] sm:$0xff]
    %v319 = vld [vmem:[#allocation3 + $0x30] sm:$0xff]
    %v320 = vld [vmem:[#allocation3 + $0x38] sm:$0xff]
    %v321 = vld [vmem:[#allocation3 + $0x40] sm:$0xff]
    %v322 = vld [vmem:[#allocation3 + $0x48] sm:$0xff]
    %v323 = vld [vmem:[#allocation3 + $0x50] sm:$0xff]
    %v324 = vld [vmem:[#allocation3 + $0x58] sm:$0xff]
    %v325 = vld [vmem:[#allocation3 + $0x60] sm:$0xff]
    %v326 = vld [vmem:[#allocation3 + $0x68] sm:$0xff]
    %v327 = vld [vmem:[#allocation3 + $0x70] sm:$0xff]
    %v328 = vld [vmem:[#allocation3 + $0x78] sm:$0xff]
    %v329 = vld [vmem:[#allocation3 + $0x80] sm:$0xff]
    %v330 = vld [vmem:[#allocation3 + $0x88] sm:$0xff]
    %v331 = vld [vmem:[#allocation3 + $0x90] sm:$0xff]
    %v332 = vld [vmem:[#allocation3 + $0x98] sm:$0xff]
    %v333 = vld [vmem:[#allocation3 + $0xa0] sm:$0xff]
    %v334 = vld [vmem:[#allocation3 + $0xa8] sm:$0xff]
    %v335 = vld [vmem:[#allocation3 + $0xb0] sm:$0xff]
    %v336 = vld [vmem:[#allocation3 + $0xb8] sm:$0xff]
    %v337 = vld [vmem:[#allocation3 + $0xc0] sm:$0xff]
    %v338 = vld [vmem:[#allocation3 + $0xc8] sm:$0xff]
    %v339 = vld [vmem:[#allocation3 + $0xd0] sm:$0xff]
    %v340 = vld [vmem:[#allocation3 + $0xd8] sm:$0xff]
    %v341 = vld [vmem:[#allocation3 + $0xe0] sm:$0xff]
    %v342 = vld [vmem:[#allocation3 + $0xe8] sm:$0xff]
    %v343 = vld [vmem:[#allocation3 + $0xf0] sm:$0xff]
    %v344 = vld [vmem:[#allocation3 + $0xf8] sm:$0xff]
    %v377 = vunpack.c.l.b16 %v313
    %v378 = vunpack.c.h.b16 %v313
    %v379 = vunpack.c.l.b16 %v314
    %v380 = vunpack.c.h.b16 %v314
    %v381 = vunpack.c.l.b16 %v315
    %v382 = vunpack.c.h.b16 %v315
    %v383 = vunpack.c.l.b16 %v316
    %v384 = vunpack.c.h.b16 %v316
    %v385 = vunpack.c.l.b16 %v317
    %v386 = vunpack.c.h.b16 %v317
    %v387 = vunpack.c.l.b16 %v318
    %v388 = vunpack.c.h.b16 %v318
    %v389 = vunpack.c.l.b16 %v319
    %v390 = vunpack.c.h.b16 %v319
    %v391 = vunpack.c.l.b16 %v320
    %v392 = vunpack.c.h.b16 %v320
    %v393 = vunpack.c.l.b16 %v321
    %v394 = vunpack.c.h.b16 %v321
    %v395 = vunpack.c.l.b16 %v322
    %v396 = vunpack.c.h.b16 %v322
    %v397 = vunpack.c.l.b16 %v323
    %v398 = vunpack.c.h.b16 %v323
    %v399 = vunpack.c.l.b16 %v324
    %v400 = vunpack.c.h.b16 %v324
    %v401 = vunpack.c.l.b16 %v325
    %v402 = vunpack.c.h.b16 %v325
    %v403 = vunpack.c.l.b16 %v326
    %v404 = vunpack.c.h.b16 %v326
    %v405 = vunpack.c.l.b16 %v327
    %v406 = vunpack.c.h.b16 %v327
    %v407 = vunpack.c.l.b16 %v328
    %v408 = vunpack.c.h.b16 %v328
    %v409 = vunpack.c.l.b16 %v329
    %v410 = vunpack.c.h.b16 %v329
    %v411 = vunpack.c.l.b16 %v330
    %v412 = vunpack.c.h.b16 %v330
    %v413 = vunpack.c.l.b16 %v331
    %v414 = vunpack.c.h.b16 %v331
    %v415 = vunpack.c.l.b16 %v332
    %v416 = vunpack.c.h.b16 %v332
    %v417 = vunpack.c.l.b16 %v333
    %v418 = vunpack.c.h.b16 %v333
    %v419 = vunpack.c.l.b16 %v334
    %v420 = vunpack.c.h.b16 %v334
    %v421 = vunpack.c.l.b16 %v335
    %v422 = vunpack.c.h.b16 %v335
    %v423 = vunpack.c.l.b16 %v336
    %v424 = vunpack.c.h.b16 %v336
    %v425 = vunpack.c.l.b16 %v337
    %v426 = vunpack.c.h.b16 %v337
    %v427 = vunpack.c.l.b16 %v338
    %v428 = vunpack.c.h.b16 %v338
    %v429 = vunpack.c.l.b16 %v339
    %v430 = vunpack.c.h.b16 %v339
    %v431 = vunpack.c.l.b16 %v340
    %v432 = vunpack.c.h.b16 %v340
    %v433 = vunpack.c.l.b16 %v341
    %v434 = vunpack.c.h.b16 %v341
    %v435 = vunpack.c.l.b16 %v342
    %v436 = vunpack.c.h.b16 %v342
    %v437 = vunpack.c.l.b16 %v343
    %v438 = vunpack.c.h.b16 %v343
    %v439 = vunpack.c.l.b16 %v344
    %v440 = vunpack.c.h.b16 %v344
    %v441 = vpack.c.b16 %v381, %v377
    %v442 = vpack.c.b16 %v382, %v378
    %v443 = vpack.c.b16 %v383, %v379
    %v444 = vpack.c.b16 %v384, %v380
    %v445 = vpack.c.b16 %v389, %v385
    %v446 = vpack.c.b16 %v390, %v386
    %v447 = vpack.c.b16 %v391, %v387
    %v448 = vpack.c.b16 %v392, %v388
    %v449 = vpack.c.b16 %v397, %v393
    %v450 = vpack.c.b16 %v398, %v394
    %v451 = vpack.c.b16 %v399, %v395
    %v452 = vpack.c.b16 %v400, %v396
    %v453 = vpack.c.b16 %v405, %v401
    %v454 = vpack.c.b16 %v406, %v402
    %v455 = vpack.c.b16 %v407, %v403
    %v456 = vpack.c.b16 %v408, %v404
    %v457 = vpack.c.b16 %v413, %v409
    %v458 = vpack.c.b16 %v414, %v410
    %v459 = vpack.c.b16 %v415, %v411
    %v460 = vpack.c.b16 %v416, %v412
    %v461 = vpack.c.b16 %v421, %v417
    %v462 = vpack.c.b16 %v422, %v418
    %v463 = vpack.c.b16 %v423, %v419
    %v464 = vpack.c.b16 %v424, %v420
    %v465 = vpack.c.b16 %v429, %v425
    %v466 = vpack.c.b16 %v430, %v426
    %v467 = vpack.c.b16 %v431, %v427
    %v468 = vpack.c.b16 %v432, %v428
    %v469 = vpack.c.b16 %v437, %v433
    %v470 = vpack.c.b16 %v438, %v434
    %v471 = vpack.c.b16 %v439, %v435
    %v472 = vpack.c.b16 %v440, %v436
    %505 = vmatpush.bf16.msra.mxu0 %v469
    %506 = vmatpush.bf16.msra.mxu0 %v465
    %507 = vmatpush.bf16.msra.mxu0 %v461
    %508 = vmatpush.bf16.msra.mxu0 %v457
    %509 = vmatpush.bf16.msra.mxu0 %v453
    %510 = vmatpush.bf16.msra.mxu0 %v449
    %511 = vmatpush.bf16.msra.mxu0 %v445
    %512 = vmatpush.bf16.msra.mxu0 %v441
    %513 = vmatmul.bf16.gmra.mxu0 0
    %v514 = vpop.f32.mrf.mxu0
    %v515 = vadd.f32 0.0, %v514
    %v516 = vpop.f32.mrf.mxu0
    %517 = vdwg.mxu0
    %518 = vmatpush.bf16.msra.mxu0 %v470
    %519 = vmatpush.bf16.msra.mxu0 %v466
    %520 = vmatpush.bf16.msra.mxu0 %v462
    %521 = vmatpush.bf16.msra.mxu0 %v458
    %522 = vmatpush.bf16.msra.mxu0 %v454
    %523 = vmatpush.bf16.msra.mxu0 %v450
    %524 = vmatpush.bf16.msra.mxu0 %v446
    %525 = vmatpush.bf16.msra.mxu0 %v442
    %526 = vmatmul.bf16.gmra.mxu0 0
    %v527 = vpop.f32.mrf.mxu0
    %v528 = vadd.f32 0.0, %v527
    %v529 = vpop.f32.mrf.mxu0
    %530 = vdwg.mxu0
    %531 = vmatpush.bf16.msra.mxu0 %v471
    %532 = vmatpush.bf16.msra.mxu0 %v467
    %533 = vmatpush.bf16.msra.mxu0 %v463
    %534 = vmatpush.bf16.msra.mxu0 %v459
    %535 = vmatpush.bf16.msra.mxu0 %v455
    %536 = vmatpush.bf16.msra.mxu0 %v451
    %537 = vmatpush.bf16.msra.mxu0 %v447
    %538 = vmatpush.bf16.msra.mxu0 %v443
    %539 = vmatmul.bf16.gmra.mxu0 0
    %v540 = vpop.f32.mrf.mxu0
    %v541 = vadd.f32 0.0, %v540
    %v542 = vpop.f32.mrf.mxu0
    %543 = vdwg.mxu0
    %544 = vmatpush.bf16.msra.mxu0 %v472
    %545 = vmatpush.bf16.msra.mxu0 %v468
    %546 = vmatpush.bf16.msra.mxu0 %v464
    %547 = vmatpush.bf16.msra.mxu0 %v460
    %548 = vmatpush.bf16.msra.mxu0 %v456
    %549 = vmatpush.bf16.msra.mxu0 %v452
    %550 = vmatpush.bf16.msra.mxu0 %v448
    %551 = vmatpush.bf16.msra.mxu0 %v444
    %552 = vmatmul.bf16.gmra.mxu0 0
    %v553 = vpop.f32.mrf.mxu0
    %v554 = vadd.f32 0.0, %v553
    %v555 = vpop.f32.mrf.mxu0
    %556 = vdwg.mxu0
    %v557 = vadd.f32 %v309, %v515
    %v558 = vadd.f32 %v310, %v528
    %v559 = vadd.f32 %v311, %v541
    %v560 = vadd.f32 %v312, %v554
    %v561 = vxor.u32 %v557, 2147483648
    %v562 = vmul.f32 %v561, 1.442695
    %v563 = vpow.pop %v562
    %v564 = vadd.f32 %v563, 1.0
    %v565 = vrcp.pop %v564
    %v566 = vmul.f32 %v564, %v565
    %v567 = vsub.f32 1.0, %v566
    %v568 = vmul.f32 %v565, %v567
    %v569 = vadd.f32 %v565, %v568
    %vm570 = vweird.f32 %v564
    %vm571 = vweird.f32 %v565
    %vm572 = vmor %vm570, %vm571
    %v573 = vsel %vm572, %v565, %v569
    %v574 = vand.u32 2147483647, %v564
    %vm575 = vcmp.eq.f32.partialorder %v574, 8.507059e+37
    %v576 = vand.u32 %v564, 2147483648
    %v577 = vor.u32 1.1754944e-38, %v576
    %v578 = vsel %vm575, %v577, %v573
    %v579 = vmul.f32 1.0, %v578
    %v580 = vxor.u32 %v558, 2147483648
    %v581 = vmul.f32 %v580, 1.442695
    %v582 = vpow.pop %v581
    %v583 = vadd.f32 %v582, 1.0
    %v584 = vrcp.pop %v583
    %v585 = vmul.f32 %v583, %v584
    %v586 = vsub.f32 1.0, %v585
    %v587 = vmul.f32 %v584, %v586
    %v588 = vadd.f32 %v584, %v587
    %vm589 = vweird.f32 %v583
    %vm590 = vweird.f32 %v584
    %vm591 = vmor %vm589, %vm590
    %v592 = vsel %vm591, %v584, %v588
    %v593 = vand.u32 2147483647, %v583
    %vm594 = vcmp.eq.f32.partialorder %v593, 8.507059e+37
    %v595 = vand.u32 %v583, 2147483648
    %v596 = vor.u32 1.1754944e-38, %v595
    %v597 = vsel %vm594, %v596, %v592
    %v598 = vmul.f32 1.0, %v597
    %v599 = vtanh.pop %v559
    %v600 = vxor.u32 %v560, 2147483648
    %v601 = vmul.f32 %v600, 1.442695
    %v602 = vpow.pop %v601
    %v603 = vadd.f32 %v602, 1.0
    %v604 = vrcp.pop %v603
    %v605 = vmul.f32 %v603, %v604
    %v606 = vsub.f32 1.0, %v605
    %v607 = vmul.f32 %v604, %v606
    %v608 = vadd.f32 %v604, %v607
    %vm609 = vweird.f32 %v603
    %vm610 = vweird.f32 %v604
    %vm611 = vmor %vm609, %vm610
    %v612 = vsel %vm611, %v604, %v608
    %v613 = vand.u32 2147483647, %v603
    %vm614 = vcmp.eq.f32.partialorder %v613, 8.507059e+37
    %v615 = vand.u32 %v603, 2147483648
    %v616 = vor.u32 1.1754944e-38, %v615
    %v617 = vsel %vm614, %v616, %v612
    %v618 = vmul.f32 1.0, %v617
    %v619 = vmul.f32 %v598, 0.0
    %v620 = vmul.f32 %v579, %v599
    %v621 = vadd.f32 %v619, %v620
    %v622 = vtanh.pop %v621
    %v623 = vmul.f32 %v618, %v622
    %s624 = smul.u32 1, 4
    %s625 = smul.addr %s624, 8
    %s626 = scalar_lea.vmem [#allocation2], %s625
    %v627 = vld [vmem:[%s626] sm:$0xff]
    %v628 = vld [vmem:[%s626 + $0x8] sm:$0xff]
    %v629 = vld [vmem:[%s626 + $0x10] sm:$0xff]
    %v630 = vld [vmem:[%s626 + $0x18] sm:$0xff]
    %v631 = vpack.c.bf16 %v623, %v623
    %632 = vmatpush.bf16.msra.mxu0 %v469
    %633 = vmatpush.bf16.msra.mxu0 %v465
    %634 = vmatpush.bf16.msra.mxu0 %v461
    %635 = vmatpush.bf16.msra.mxu0 %v457
    %636 = vmatpush.bf16.msra.mxu0 %v453
    %637 = vmatpush.bf16.msra.mxu0 %v449
    %638 = vmatpush.bf16.msra.mxu0 %v445
    %639 = vmatpush.bf16.msra.mxu0 %v441
    %640 = vmatmul.bf16.gmra.mxu0 %v631
    %v641 = vpop.f32.mrf.mxu0
    %v642 = vadd.f32 0.0, %v641
    %v643 = vpop.f32.mrf.mxu0
    %644 = vdwg.mxu0
    %645 = vmatpush.bf16.msra.mxu0 %v470
    %646 = vmatpush.bf16.msra.mxu0 %v466
    %647 = vmatpush.bf16.msra.mxu0 %v462
    %648 = vmatpush.bf16.msra.mxu0 %v458
    %649 = vmatpush.bf16.msra.mxu0 %v454
    %650 = vmatpush.bf16.msra.mxu0 %v450
    %651 = vmatpush.bf16.msra.mxu0 %v446
    %652 = vmatpush.bf16.msra.mxu0 %v442
    %653 = vmatmul.bf16.gmra.mxu0 %v631
    %v654 = vpop.f32.mrf.mxu0
    %v655 = vadd.f32 0.0, %v654
    %v656 = vpop.f32.mrf.mxu0
    %657 = vdwg.mxu0
    %658 = vmatpush.bf16.msra.mxu0 %v471
    %659 = vmatpush.bf16.msra.mxu0 %v467
    %660 = vmatpush.bf16.msra.mxu0 %v463
    %661 = vmatpush.bf16.msra.mxu0 %v459
    %662 = vmatpush.bf16.msra.mxu0 %v455
    %663 = vmatpush.bf16.msra.mxu0 %v451
    %664 = vmatpush.bf16.msra.mxu0 %v447
    %665 = vmatpush.bf16.msra.mxu0 %v443
    %666 = vmatmul.bf16.gmra.mxu0 %v631
    %v667 = vpop.f32.mrf.mxu0
    %v668 = vadd.f32 0.0, %v667
    %v669 = vpop.f32.mrf.mxu0
    %670 = vdwg.mxu0
    %671 = vmatpush.bf16.msra.mxu0 %v472
    %672 = vmatpush.bf16.msra.mxu0 %v468
    %673 = vmatpush.bf16.msra.mxu0 %v464
    %674 = vmatpush.bf16.msra.mxu0 %v460
    %675 = vmatpush.bf16.msra.mxu0 %v456
    %676 = vmatpush.bf16.msra.mxu0 %v452
    %677 = vmatpush.bf16.msra.mxu0 %v448
    %678 = vmatpush.bf16.msra.mxu0 %v444
    %679 = vmatmul.bf16.gmra.mxu0 %v631
    %v680 = vpop.f32.mrf.mxu0
    %v681 = vadd.f32 0.0, %v680
    %v682 = vpop.f32.mrf.mxu0
    %683 = vdwg.mxu0
    %v684 = vadd.f32 %v627, %v642
    %v685 = vadd.f32 %v628, %v655
    %v686 = vadd.f32 %v629, %v668
    %v687 = vadd.f32 %v630, %v681
    %v688 = vxor.u32 %v684, 2147483648
    %v689 = vmul.f32 %v688, 1.442695
    %v690 = vpow.pop %v689
    %v691 = vadd.f32 %v690, 1.0
    %v692 = vrcp.pop %v691
    %v693 = vmul.f32 %v691, %v692
    %v694 = vsub.f32 1.0, %v693
    %v695 = vmul.f32 %v692, %v694
    %v696 = vadd.f32 %v692, %v695
    %vm697 = vweird.f32 %v691
    %vm698 = vweird.f32 %v692
    %vm699 = vmor %vm697, %vm698
    %v700 = vsel %vm699, %v692, %v696
    %v701 = vand.u32 2147483647, %v691
    %vm702 = vcmp.eq.f32.partialorder %v701, 8.507059e+37
    %v703 = vand.u32 %v691, 2147483648
    %v704 = vor.u32 1.1754944e-38, %v703
    %v705 = vsel %vm702, %v704, %v700
    %v706 = vmul.f32 1.0, %v705
    %v707 = vxor.u32 %v685, 2147483648
    %v708 = vmul.f32 %v707, 1.442695
    %v709 = vpow.pop %v708
    %v710 = vadd.f32 %v709, 1.0
    %v711 = vrcp.pop %v710
    %v712 = vmul.f32 %v710, %v711
    %v713 = vsub.f32 1.0, %v712
    %v714 = vmul.f32 %v711, %v713
    %v715 = vadd.f32 %v711, %v714
    %vm716 = vweird.f32 %v710
    %vm717 = vweird.f32 %v711
    %vm718 = vmor %vm716, %vm717
    %v719 = vsel %vm718, %v711, %v715
    %v720 = vand.u32 2147483647, %v710
    %vm721 = vcmp.eq.f32.partialorder %v720, 8.507059e+37
    %v722 = vand.u32 %v710, 2147483648
    %v723 = vor.u32 1.1754944e-38, %v722
    %v724 = vsel %vm721, %v723, %v719
    %v725 = vmul.f32 1.0, %v724
    %v726 = vtanh.pop %v686
    %v727 = vxor.u32 %v687, 2147483648
    %v728 = vmul.f32 %v727, 1.442695
    %v729 = vpow.pop %v728
    %v730 = vadd.f32 %v729, 1.0
    %v731 = vrcp.pop %v730
    %v732 = vmul.f32 %v730, %v731
    %v733 = vsub.f32 1.0, %v732
    %v734 = vmul.f32 %v731, %v733
    %v735 = vadd.f32 %v731, %v734
    %vm736 = vweird.f32 %v730
    %vm737 = vweird.f32 %v731
    %vm738 = vmor %vm736, %vm737
    %v739 = vsel %vm738, %v731, %v735
    %v740 = vand.u32 2147483647, %v730
    %vm741 = vcmp.eq.f32.partialorder %v740, 8.507059e+37
    %v742 = vand.u32 %v730, 2147483648
    %v743 = vor.u32 1.1754944e-38, %v742
    %v744 = vsel %vm741, %v743, %v739
    %v745 = vmul.f32 1.0, %v744
    %v746 = vmul.f32 %v725, %v621
    %v747 = vmul.f32 %v706, %v726
    %v748 = vadd.f32 %v746, %v747
    %v749 = vtanh.pop %v748
    %v750 = vmul.f32 %v745, %v749
    %s751 = smul.u32 2, 4
    %s752 = smul.addr %s751, 8
    %s753 = scalar_lea.vmem [#allocation2], %s752
    %v754 = vld [vmem:[%s753] sm:$0xff]
    %v755 = vld [vmem:[%s753 + $0x8] sm:$0xff]
    %v756 = vld [vmem:[%s753 + $0x10] sm:$0xff]
    %v757 = vld [vmem:[%s753 + $0x18] sm:$0xff]
    %v758 = vpack.c.bf16 %v750, %v750
    %759 = vmatpush.bf16.msra.mxu0 %v469
    %760 = vmatpush.bf16.msra.mxu0 %v465
    %761 = vmatpush.bf16.msra.mxu0 %v461
    %762 = vmatpush.bf16.msra.mxu0 %v457
    %763 = vmatpush.bf16.msra.mxu0 %v453
    %764 = vmatpush.bf16.msra.mxu0 %v449
    %765 = vmatpush.bf16.msra.mxu0 %v445
    %766 = vmatpush.bf16.msra.mxu0 %v441
    %767 = vmatmul.bf16.gmra.mxu0 %v758
    %v768 = vpop.f32.mrf.mxu0
    %v769 = vadd.f32 0.0, %v768
    %v770 = vpop.f32.mrf.mxu0
    %771 = vdwg.mxu0
    %772 = vmatpush.bf16.msra.mxu0 %v470
    %773 = vmatpush.bf16.msra.mxu0 %v466
    %774 = vmatpush.bf16.msra.mxu0 %v462
    %775 = vmatpush.bf16.msra.mxu0 %v458
    %776 = vmatpush.bf16.msra.mxu0 %v454
    %777 = vmatpush.bf16.msra.mxu0 %v450
    %778 = vmatpush.bf16.msra.mxu0 %v446
    %779 = vmatpush.bf16.msra.mxu0 %v442
    %780 = vmatmul.bf16.gmra.mxu0 %v758
    %v781 = vpop.f32.mrf.mxu0
    %v782 = vadd.f32 0.0, %v781
    %v783 = vpop.f32.mrf.mxu0
    %784 = vdwg.mxu0
    %785 = vmatpush.bf16.msra.mxu0 %v471
    %786 = vmatpush.bf16.msra.mxu0 %v467
    %787 = vmatpush.bf16.msra.mxu0 %v463
    %788 = vmatpush.bf16.msra.mxu0 %v459
    %789 = vmatpush.bf16.msra.mxu0 %v455
    %790 = vmatpush.bf16.msra.mxu0 %v451
    %791 = vmatpush.bf16.msra.mxu0 %v447
    %792 = vmatpush.bf16.msra.mxu0 %v443
    %793 = vmatmul.bf16.gmra.mxu0 %v758
    %v794 = vpop.f32.mrf.mxu0
    %v795 = vadd.f32 0.0, %v794
    %v796 = vpop.f32.mrf.mxu0
    %797 = vdwg.mxu0
    %798 = vmatpush.bf16.msra.mxu0 %v472
    %799 = vmatpush.bf16.msra.mxu0 %v468
    %800 = vmatpush.bf16.msra.mxu0 %v464
    %801 = vmatpush.bf16.msra.mxu0 %v460
    %802 = vmatpush.bf16.msra.mxu0 %v456
    %803 = vmatpush.bf16.msra.mxu0 %v452
    %804 = vmatpush.bf16.msra.mxu0 %v448
    %805 = vmatpush.bf16.msra.mxu0 %v444
    %806 = vmatmul.bf16.gmra.mxu0 %v758
    %v807 = vpop.f32.mrf.mxu0
    %v808 = vadd.f32 0.0, %v807
    %v809 = vpop.f32.mrf.mxu0
    %810 = vdwg.mxu0
    %v811 = vadd.f32 %v754, %v769
    %v812 = vadd.f32 %v755, %v782
    %v813 = vadd.f32 %v756, %v795
    %v814 = vadd.f32 %v757, %v808
    %v815 = vxor.u32 %v811, 2147483648
    %v816 = vmul.f32 %v815, 1.442695
    %v817 = vpow.pop %v816
    %v818 = vadd.f32 %v817, 1.0
    %v819 = vrcp.pop %v818
    %v820 = vmul.f32 %v818, %v819
    %v821 = vsub.f32 1.0, %v820
    %v822 = vmul.f32 %v819, %v821
    %v823 = vadd.f32 %v819, %v822
    %vm824 = vweird.f32 %v818
    %vm825 = vweird.f32 %v819
    %vm826 = vmor %vm824, %vm825
    %v827 = vsel %vm826, %v819, %v823
    %v828 = vand.u32 2147483647, %v818
    %vm829 = vcmp.eq.f32.partialorder %v828, 8.507059e+37
    %v830 = vand.u32 %v818, 2147483648
    %v831 = vor.u32 1.1754944e-38, %v830
    %v832 = vsel %vm829, %v831, %v827
    %v833 = vmul.f32 1.0, %v832
    %v834 = vxor.u32 %v812, 2147483648
    %v835 = vmul.f32 %v834, 1.442695
    %v836 = vpow.pop %v835
    %v837 = vadd.f32 %v836, 1.0
    %v838 = vrcp.pop %v837
    %v839 = vmul.f32 %v837, %v838
    %v840 = vsub.f32 1.0, %v839
    %v841 = vmul.f32 %v838, %v840
    %v842 = vadd.f32 %v838, %v841
    %vm843 = vweird.f32 %v837
    %vm844 = vweird.f32 %v838
    %vm845 = vmor %vm843, %vm844
    %v846 = vsel %vm845, %v838, %v842
    %v847 = vand.u32 2147483647, %v837
    %vm848 = vcmp.eq.f32.partialorder %v847, 8.507059e+37
    %v849 = vand.u32 %v837, 2147483648
    %v850 = vor.u32 1.1754944e-38, %v849
    %v851 = vsel %vm848, %v850, %v846
    %v852 = vmul.f32 1.0, %v851
    %v853 = vtanh.pop %v813
    %v854 = vxor.u32 %v814, 2147483648
    %v855 = vmul.f32 %v854, 1.442695
    %v856 = vpow.pop %v855
    %v857 = vadd.f32 %v856, 1.0
    %v858 = vrcp.pop %v857
    %v859 = vmul.f32 %v857, %v858
    %v860 = vsub.f32 1.0, %v859
    %v861 = vmul.f32 %v858, %v860
    %v862 = vadd.f32 %v858, %v861
    %vm863 = vweird.f32 %v857
    %vm864 = vweird.f32 %v858
    %vm865 = vmor %vm863, %vm864
    %v866 = vsel %vm865, %v858, %v862
    %v867 = vand.u32 2147483647, %v857
    %vm868 = vcmp.eq.f32.partialorder %v867, 8.507059e+37
    %v869 = vand.u32 %v857, 2147483648
    %v870 = vor.u32 1.1754944e-38, %v869
    %v871 = vsel %vm868, %v870, %v866
    %v872 = vmul.f32 1.0, %v871
    %v873 = vmul.f32 %v852, %v748
    %v874 = vmul.f32 %v833, %v853
    %v875 = vadd.f32 %v873, %v874
    %v876 = vtanh.pop %v875
    %v877 = vmul.f32 %v872, %v876
    %s878 = smul.u32 3, 4
    %s879 = smul.addr %s878, 8
    %s880 = scalar_lea.vmem [#allocation2], %s879
    %v881 = vld [vmem:[%s880] sm:$0xff]
    %v882 = vld [vmem:[%s880 + $0x8] sm:$0xff]
    %v883 = vld [vmem:[%s880 + $0x10] sm:$0xff]
    %v884 = vld [vmem:[%s880 + $0x18] sm:$0xff]
    %v885 = vpack.c.bf16 %v877, %v877
    %886 = vmatpush.bf16.msra.mxu0 %v469
    %887 = vmatpush.bf16.msra.mxu0 %v465
    %888 = vmatpush.bf16.msra.mxu0 %v461
    %889 = vmatpush.bf16.msra.mxu0 %v457
    %890 = vmatpush.bf16.msra.mxu0 %v453
    %891 = vmatpush.bf16.msra.mxu0 %v449
    %892 = vmatpush.bf16.msra.mxu0 %v445
    %893 = vmatpush.bf16.msra.mxu0 %v441
    %894 = vmatmul.bf16.gmra.mxu0 %v885
    %v895 = vpop.f32.mrf.mxu0
    %v896 = vadd.f32 0.0, %v895
    %v897 = vpop.f32.mrf.mxu0
    %898 = vdwg.mxu0
    %899 = vmatpush.bf16.msra.mxu0 %v470
    %900 = vmatpush.bf16.msra.mxu0 %v466
    %901 = vmatpush.bf16.msra.mxu0 %v462
    %902 = vmatpush.bf16.msra.mxu0 %v458
    %903 = vmatpush.bf16.msra.mxu0 %v454
    %904 = vmatpush.bf16.msra.mxu0 %v450
    %905 = vmatpush.bf16.msra.mxu0 %v446
    %906 = vmatpush.bf16.msra.mxu0 %v442
    %907 = vmatmul.bf16.gmra.mxu0 %v885
    %v908 = vpop.f32.mrf.mxu0
    %v909 = vadd.f32 0.0, %v908
    %v910 = vpop.f32.mrf.mxu0
    %911 = vdwg.mxu0
    %912 = vmatpush.bf16.msra.mxu0 %v471
    %913 = vmatpush.bf16.msra.mxu0 %v467
    %914 = vmatpush.bf16.msra.mxu0 %v463
    %915 = vmatpush.bf16.msra.mxu0 %v459
    %916 = vmatpush.bf16.msra.mxu0 %v455
    %917 = vmatpush.bf16.msra.mxu0 %v451
    %918 = vmatpush.bf16.msra.mxu0 %v447
    %919 = vmatpush.bf16.msra.mxu0 %v443
    %920 = vmatmul.bf16.gmra.mxu0 %v885
    %v921 = vpop.f32.mrf.mxu0
    %v922 = vadd.f32 0.0, %v921
    %v923 = vpop.f32.mrf.mxu0
    %924 = vdwg.mxu0
    %925 = vmatpush.bf16.msra.mxu0 %v472
    %926 = vmatpush.bf16.msra.mxu0 %v468
    %927 = vmatpush.bf16.msra.mxu0 %v464
    %928 = vmatpush.bf16.msra.mxu0 %v460
    %929 = vmatpush.bf16.msra.mxu0 %v456
    %930 = vmatpush.bf16.msra.mxu0 %v452
    %931 = vmatpush.bf16.msra.mxu0 %v448
    %932 = vmatpush.bf16.msra.mxu0 %v444
    %933 = vmatmul.bf16.gmra.mxu0 %v885
    %v934 = vpop.f32.mrf.mxu0
    %v935 = vadd.f32 0.0, %v934
    %v936 = vpop.f32.mrf.mxu0
    %937 = vdwg.mxu0
    %v938 = vadd.f32 %v881, %v896
    %v939 = vadd.f32 %v882, %v909
    %v940 = vadd.f32 %v883, %v922
    %v941 = vadd.f32 %v884, %v935
    %v942 = vxor.u32 %v938, 2147483648
    %v943 = vmul.f32 %v942, 1.442695
    %v944 = vpow.pop %v943
    %v945 = vadd.f32 %v944, 1.0
    %v946 = vrcp.pop %v945
    %v947 = vmul.f32 %v945, %v946
    %v948 = vsub.f32 1.0, %v947
    %v949 = vmul.f32 %v946, %v948
    %v950 = vadd.f32 %v946, %v949
    %vm951 = vweird.f32 %v945
    %vm952 = vweird.f32 %v946
    %vm953 = vmor %vm951, %vm952
    %v954 = vsel %vm953, %v946, %v950
    %v955 = vand.u32 2147483647, %v945
    %vm956 = vcmp.eq.f32.partialorder %v955, 8.507059e+37
    %v957 = vand.u32 %v945, 2147483648
    %v958 = vor.u32 1.1754944e-38, %v957
    %v959 = vsel %vm956, %v958, %v954
    %v960 = vmul.f32 1.0, %v959
    %v961 = vxor.u32 %v939, 2147483648
    %v962 = vmul.f32 %v961, 1.442695
    %v963 = vpow.pop %v962
    %v964 = vadd.f32 %v963, 1.0
    %v965 = vrcp.pop %v964
    %v966 = vmul.f32 %v964, %v965
    %v967 = vsub.f32 1.0, %v966
    %v968 = vmul.f32 %v965, %v967
    %v969 = vadd.f32 %v965, %v968
    %vm970 = vweird.f32 %v964
    %vm971 = vweird.f32 %v965
    %vm972 = vmor %vm970, %vm971
    %v973 = vsel %vm972, %v965, %v969
    %v974 = vand.u32 2147483647, %v964
    %vm975 = vcmp.eq.f32.partialorder %v974, 8.507059e+37
    %v976 = vand.u32 %v964, 2147483648
    %v977 = vor.u32 1.1754944e-38, %v976
    %v978 = vsel %vm975, %v977, %v973
    %v979 = vmul.f32 1.0, %v978
    %v980 = vtanh.pop %v940
    %v981 = vxor.u32 %v941, 2147483648
    %v982 = vmul.f32 %v981, 1.442695
    %v983 = vpow.pop %v982
    %v984 = vadd.f32 %v983, 1.0
    %v985 = vrcp.pop %v984
    %v986 = vmul.f32 %v984, %v985
    %v987 = vsub.f32 1.0, %v986
    %v988 = vmul.f32 %v985, %v987
    %v989 = vadd.f32 %v985, %v988
    %vm990 = vweird.f32 %v984
    %vm991 = vweird.f32 %v985
    %vm992 = vmor %vm990, %vm991
    %v993 = vsel %vm992, %v985, %v989
    %v994 = vand.u32 2147483647, %v984
    %vm995 = vcmp.eq.f32.partialorder %v994, 8.507059e+37
    %v996 = vand.u32 %v984, 2147483648
    %v997 = vor.u32 1.1754944e-38, %v996
    %v998 = vsel %vm995, %v997, %v993
    %v999 = vmul.f32 1.0, %v998
    %v1000 = vmul.f32 %v979, %v875
    %v1001 = vmul.f32 %v960, %v980
    %v1002 = vadd.f32 %v1000, %v1001
    %v1003 = vtanh.pop %v1002
    %v1004 = vmul.f32 %v999, %v1003
    %s1005 = smul.u32 4, 4
    %s1006 = smul.addr %s1005, 8
    %s1007 = scalar_lea.vmem [#allocation2], %s1006
    %v1008 = vld [vmem:[%s1007] sm:$0xff]
    %v1009 = vld [vmem:[%s1007 + $0x8] sm:$0xff]
    %v1010 = vld [vmem:[%s1007 + $0x10] sm:$0xff]
    %v1011 = vld [vmem:[%s1007 + $0x18] sm:$0xff]
    %v1012 = vpack.c.bf16 %v1004, %v1004
    %1013 = vmatpush.bf16.msra.mxu0 %v469
    %1014 = vmatpush.bf16.msra.mxu0 %v465
    %1015 = vmatpush.bf16.msra.mxu0 %v461
    %1016 = vmatpush.bf16.msra.mxu0 %v457
    %1017 = vmatpush.bf16.msra.mxu0 %v453
    %1018 = vmatpush.bf16.msra.mxu0 %v449
    %1019 = vmatpush.bf16.msra.mxu0 %v445
    %1020 = vmatpush.bf16.msra.mxu0 %v441
    %1021 = vmatmul.bf16.gmra.mxu0 %v1012
    %v1022 = vpop.f32.mrf.mxu0
    %v1023 = vadd.f32 0.0, %v1022
    %v1024 = vpop.f32.mrf.mxu0
    %1025 = vdwg.mxu0
    %1026 = vmatpush.bf16.msra.mxu0 %v470
    %1027 = vmatpush.bf16.msra.mxu0 %v466
    %1028 = vmatpush.bf16.msra.mxu0 %v462
    %1029 = vmatpush.bf16.msra.mxu0 %v458
    %1030 = vmatpush.bf16.msra.mxu0 %v454
    %1031 = vmatpush.bf16.msra.mxu0 %v450
    %1032 = vmatpush.bf16.msra.mxu0 %v446
    %1033 = vmatpush.bf16.msra.mxu0 %v442
    %1034 = vmatmul.bf16.gmra.mxu0 %v1012
    %v1035 = vpop.f32.mrf.mxu0
    %v1036 = vadd.f32 0.0, %v1035
    %v1037 = vpop.f32.mrf.mxu0
    %1038 = vdwg.mxu0
    %1039 = vmatpush.bf16.msra.mxu0 %v471
    %1040 = vmatpush.bf16.msra.mxu0 %v467
    %1041 = vmatpush.bf16.msra.mxu0 %v463
    %1042 = vmatpush.bf16.msra.mxu0 %v459
    %1043 = vmatpush.bf16.msra.mxu0 %v455
    %1044 = vmatpush.bf16.msra.mxu0 %v451
    %1045 = vmatpush.bf16.msra.mxu0 %v447
    %1046 = vmatpush.bf16.msra.mxu0 %v443
    %1047 = vmatmul.bf16.gmra.mxu0 %v1012
    %v1048 = vpop.f32.mrf.mxu0
    %v1049 = vadd.f32 0.0, %v1048
    %v1050 = vpop.f32.mrf.mxu0
    %1051 = vdwg.mxu0
    %1052 = vmatpush.bf16.msra.mxu0 %v472
    %1053 = vmatpush.bf16.msra.mxu0 %v468
    %1054 = vmatpush.bf16.msra.mxu0 %v464
    %1055 = vmatpush.bf16.msra.mxu0 %v460
    %1056 = vmatpush.bf16.msra.mxu0 %v456
    %1057 = vmatpush.bf16.msra.mxu0 %v452
    %1058 = vmatpush.bf16.msra.mxu0 %v448
    %1059 = vmatpush.bf16.msra.mxu0 %v444
    %1060 = vmatmul.bf16.gmra.mxu0 %v1012
    %v1061 = vpop.f32.mrf.mxu0
    %v1062 = vadd.f32 0.0, %v1061
    %v1063 = vpop.f32.mrf.mxu0
    %1064 = vdwg.mxu0
    %v1065 = vadd.f32 %v1008, %v1023
    %v1066 = vadd.f32 %v1009, %v1036
    %v1067 = vadd.f32 %v1010, %v1049
    %v1068 = vadd.f32 %v1011, %v1062
    %v1069 = vxor.u32 %v1065, 2147483648
    %v1070 = vmul.f32 %v1069, 1.442695
    %v1071 = vpow.pop %v1070
    %v1072 = vadd.f32 %v1071, 1.0
    %v1073 = vrcp.pop %v1072
    %v1074 = vmul.f32 %v1072, %v1073
    %v1075 = vsub.f32 1.0, %v1074
    %v1076 = vmul.f32 %v1073, %v1075
    %v1077 = vadd.f32 %v1073, %v1076
    %vm1078 = vweird.f32 %v1072
    %vm1079 = vweird.f32 %v1073
    %vm1080 = vmor %vm1078, %vm1079
    %v1081 = vsel %vm1080, %v1073, %v1077
    %v1082 = vand.u32 2147483647, %v1072
    %vm1083 = vcmp.eq.f32.partialorder %v1082, 8.507059e+37
    %v1084 = vand.u32 %v1072, 2147483648
    %v1085 = vor.u32 1.1754944e-38, %v1084
    %v1086 = vsel %vm1083, %v1085, %v1081
    %v1087 = vmul.f32 1.0, %v1086
    %v1088 = vxor.u32 %v1066, 2147483648
    %v1089 = vmul.f32 %v1088, 1.442695
    %v1090 = vpow.pop %v1089
    %v1091 = vadd.f32 %v1090, 1.0
    %v1092 = vrcp.pop %v1091
    %v1093 = vmul.f32 %v1091, %v1092
    %v1094 = vsub.f32 1.0, %v1093
    %v1095 = vmul.f32 %v1092, %v1094
    %v1096 = vadd.f32 %v1092, %v1095
    %vm1097 = vweird.f32 %v1091
    %vm1098 = vweird.f32 %v1092
    %vm1099 = vmor %vm1097, %vm1098
    %v1100 = vsel %vm1099, %v1092, %v1096
    %v1101 = vand.u32 2147483647, %v1091
    %vm1102 = vcmp.eq.f32.partialorder %v1101, 8.507059e+37
    %v1103 = vand.u32 %v1091, 2147483648
    %v1104 = vor.u32 1.1754944e-38, %v1103
    %v1105 = vsel %vm1102, %v1104, %v1100
    %v1106 = vmul.f32 1.0, %v1105
    %v1107 = vtanh.pop %v1067
    %v1108 = vxor.u32 %v1068, 2147483648
    %v1109 = vmul.f32 %v1108, 1.442695
    %v1110 = vpow.pop %v1109
    %v1111 = vadd.f32 %v1110, 1.0
    %v1112 = vrcp.pop %v1111
    %v1113 = vmul.f32 %v1111, %v1112
    %v1114 = vsub.f32 1.0, %v1113
    %v1115 = vmul.f32 %v1112, %v1114
    %v1116 = vadd.f32 %v1112, %v1115
    %vm1117 = vweird.f32 %v1111
    %vm1118 = vweird.f32 %v1112
    %vm1119 = vmor %vm1117, %vm1118
    %v1120 = vsel %vm1119, %v1112, %v1116
    %v1121 = vand.u32 2147483647, %v1111
    %vm1122 = vcmp.eq.f32.partialorder %v1121, 8.507059e+37
    %v1123 = vand.u32 %v1111, 2147483648
    %v1124 = vor.u32 1.1754944e-38, %v1123
    %v1125 = vsel %vm1122, %v1124, %v1120
    %v1126 = vmul.f32 1.0, %v1125
    %v1127 = vmul.f32 %v1106, %v1002
    %v1128 = vmul.f32 %v1087, %v1107
    %v1129 = vadd.f32 %v1127, %v1128
    %v1130 = vtanh.pop %v1129
    %v1131 = vmul.f32 %v1126, %v1130
    %s1132 = smul.u32 5, 4
    %s1133 = smul.addr %s1132, 8
    %s1134 = scalar_lea.vmem [#allocation2], %s1133
    %v1135 = vld [vmem:[%s1134] sm:$0xff]
    %v1136 = vld [vmem:[%s1134 + $0x8] sm:$0xff]
    %v1137 = vld [vmem:[%s1134 + $0x10] sm:$0xff]
    %v1138 = vld [vmem:[%s1134 + $0x18] sm:$0xff]
    %v1139 = vpack.c.bf16 %v1131, %v1131
    %1140 = vmatpush.bf16.msra.mxu0 %v469
    %1141 = vmatpush.bf16.msra.mxu0 %v465
    %1142 = vmatpush.bf16.msra.mxu0 %v461
    %1143 = vmatpush.bf16.msra.mxu0 %v457
    %1144 = vmatpush.bf16.msra.mxu0 %v453
    %1145 = vmatpush.bf16.msra.mxu0 %v449
    %1146 = vmatpush.bf16.msra.mxu0 %v445
    %1147 = vmatpush.bf16.msra.mxu0 %v441
    %1148 = vmatmul.bf16.gmra.mxu0 %v1139
    %v1149 = vpop.f32.mrf.mxu0
    %v1150 = vadd.f32 0.0, %v1149
    %v1151 = vpop.f32.mrf.mxu0
    %1152 = vdwg.mxu0
    %1153 = vmatpush.bf16.msra.mxu0 %v470
    %1154 = vmatpush.bf16.msra.mxu0 %v466
    %1155 = vmatpush.bf16.msra.mxu0 %v462
    %1156 = vmatpush.bf16.msra.mxu0 %v458
    %1157 = vmatpush.bf16.msra.mxu0 %v454
    %1158 = vmatpush.bf16.msra.mxu0 %v450
    %1159 = vmatpush.bf16.msra.mxu0 %v446
    %1160 = vmatpush.bf16.msra.mxu0 %v442
    %1161 = vmatmul.bf16.gmra.mxu0 %v1139
    %v1162 = vpop.f32.mrf.mxu0
    %v1163 = vadd.f32 0.0, %v1162
    %v1164 = vpop.f32.mrf.mxu0
    %1165 = vdwg.mxu0
    %1166 = vmatpush.bf16.msra.mxu0 %v471
    %1167 = vmatpush.bf16.msra.mxu0 %v467
    %1168 = vmatpush.bf16.msra.mxu0 %v463
    %1169 = vmatpush.bf16.msra.mxu0 %v459
    %1170 = vmatpush.bf16.msra.mxu0 %v455
    %1171 = vmatpush.bf16.msra.mxu0 %v451
    %1172 = vmatpush.bf16.msra.mxu0 %v447
    %1173 = vmatpush.bf16.msra.mxu0 %v443
    %1174 = vmatmul.bf16.gmra.mxu0 %v1139
    %v1175 = vpop.f32.mrf.mxu0
    %v1176 = vadd.f32 0.0, %v1175
    %v1177 = vpop.f32.mrf.mxu0
    %1178 = vdwg.mxu0
    %1179 = vmatpush.bf16.msra.mxu0 %v472
    %1180 = vmatpush.bf16.msra.mxu0 %v468
    %1181 = vmatpush.bf16.msra.mxu0 %v464
    %1182 = vmatpush.bf16.msra.mxu0 %v460
    %1183 = vmatpush.bf16.msra.mxu0 %v456
    %1184 = vmatpush.bf16.msra.mxu0 %v452
    %1185 = vmatpush.bf16.msra.mxu0 %v448
    %1186 = vmatpush.bf16.msra.mxu0 %v444
    %1187 = vmatmul.bf16.gmra.mxu0 %v1139
    %v1188 = vpop.f32.mrf.mxu0
    %v1189 = vadd.f32 0.0, %v1188
    %v1190 = vpop.f32.mrf.mxu0
    %1191 = vdwg.mxu0
    %v1192 = vadd.f32 %v1135, %v1150
    %v1193 = vadd.f32 %v1136, %v1163
    %v1194 = vadd.f32 %v1137, %v1176
    %v1195 = vadd.f32 %v1138, %v1189
    %v1196 = vxor.u32 %v1192, 2147483648
    %v1197 = vmul.f32 %v1196, 1.442695
    %v1198 = vpow.pop %v1197
    %v1199 = vadd.f32 %v1198, 1.0
    %v1200 = vrcp.pop %v1199
    %v1201 = vmul.f32 %v1199, %v1200
    %v1202 = vsub.f32 1.0, %v1201
    %v1203 = vmul.f32 %v1200, %v1202
    %v1204 = vadd.f32 %v1200, %v1203
    %vm1205 = vweird.f32 %v1199
    %vm1206 = vweird.f32 %v1200
    %vm1207 = vmor %vm1205, %vm1206
    %v1208 = vsel %vm1207, %v1200, %v1204
    %v1209 = vand.u32 2147483647, %v1199
    %vm1210 = vcmp.eq.f32.partialorder %v1209, 8.507059e+37
    %v1211 = vand.u32 %v1199, 2147483648
    %v1212 = vor.u32 1.1754944e-38, %v1211
    %v1213 = vsel %vm1210, %v1212, %v1208
    %v1214 = vmul.f32 1.0, %v1213
    %v1215 = vxor.u32 %v1193, 2147483648
    %v1216 = vmul.f32 %v1215, 1.442695
    %v1217 = vpow.pop %v1216
    %v1218 = vadd.f32 %v1217, 1.0
    %v1219 = vrcp.pop %v1218
    %v1220 = vmul.f32 %v1218, %v1219
    %v1221 = vsub.f32 1.0, %v1220
    %v1222 = vmul.f32 %v1219, %v1221
    %v1223 = vadd.f32 %v1219, %v1222
    %vm1224 = vweird.f32 %v1218
    %vm1225 = vweird.f32 %v1219
    %vm1226 = vmor %vm1224, %vm1225
    %v1227 = vsel %vm1226, %v1219, %v1223
    %v1228 = vand.u32 2147483647, %v1218
    %vm1229 = vcmp.eq.f32.partialorder %v1228, 8.507059e+37
    %v1230 = vand.u32 %v1218, 2147483648
    %v1231 = vor.u32 1.1754944e-38, %v1230
    %v1232 = vsel %vm1229, %v1231, %v1227
    %v1233 = vmul.f32 1.0, %v1232
    %v1234 = vtanh.pop %v1194
    %v1235 = vxor.u32 %v1195, 2147483648
    %v1236 = vmul.f32 %v1235, 1.442695
    %v1237 = vpow.pop %v1236
    %v1238 = vadd.f32 %v1237, 1.0
    %v1239 = vrcp.pop %v1238
    %v1240 = vmul.f32 %v1238, %v1239
    %v1241 = vsub.f32 1.0, %v1240
    %v1242 = vmul.f32 %v1239, %v1241
    %v1243 = vadd.f32 %v1239, %v1242
    %vm1244 = vweird.f32 %v1238
    %vm1245 = vweird.f32 %v1239
    %vm1246 = vmor %vm1244, %vm1245
    %v1247 = vsel %vm1246, %v1239, %v1243
    %v1248 = vand.u32 2147483647, %v1238
    %vm1249 = vcmp.eq.f32.partialorder %v1248, 8.507059e+37
    %v1250 = vand.u32 %v1238, 2147483648
    %v1251 = vor.u32 1.1754944e-38, %v1250
    %v1252 = vsel %vm1249, %v1251, %v1247
    %v1253 = vmul.f32 1.0, %v1252
    %v1254 = vmul.f32 %v1233, %v1129
    %v1255 = vmul.f32 %v1214, %v1234
    %v1256 = vadd.f32 %v1254, %v1255
    %v1257 = vtanh.pop %v1256
    %v1258 = vmul.f32 %v1253, %v1257
    %s1259 = smul.u32 6, 4
    %s1260 = smul.addr %s1259, 8
    %s1261 = scalar_lea.vmem [#allocation2], %s1260
    %v1262 = vld [vmem:[%s1261] sm:$0xff]
    %v1263 = vld [vmem:[%s1261 + $0x8] sm:$0xff]
    %v1264 = vld [vmem:[%s1261 + $0x10] sm:$0xff]
    %v1265 = vld [vmem:[%s1261 + $0x18] sm:$0xff]
    %v1266 = vpack.c.bf16 %v1258, %v1258
    %1267 = vmatpush.bf16.msra.mxu0 %v469
    %1268 = vmatpush.bf16.msra.mxu0 %v465
    %1269 = vmatpush.bf16.msra.mxu0 %v461
    %1270 = vmatpush.bf16.msra.mxu0 %v457
    %1271 = vmatpush.bf16.msra.mxu0 %v453
    %1272 = vmatpush.bf16.msra.mxu0 %v449
    %1273 = vmatpush.bf16.msra.mxu0 %v445
    %1274 = vmatpush.bf16.msra.mxu0 %v441
    %1275 = vmatmul.bf16.gmra.mxu0 %v1266
    %v1276 = vpop.f32.mrf.mxu0
    %v1277 = vadd.f32 0.0, %v1276
    %v1278 = vpop.f32.mrf.mxu0
    %1279 = vdwg.mxu0
    %1280 = vmatpush.bf16.msra.mxu0 %v470
    %1281 = vmatpush.bf16.msra.mxu0 %v466
    %1282 = vmatpush.bf16.msra.mxu0 %v462
    %1283 = vmatpush.bf16.msra.mxu0 %v458
    %1284 = vmatpush.bf16.msra.mxu0 %v454
    %1285 = vmatpush.bf16.msra.mxu0 %v450
    %1286 = vmatpush.bf16.msra.mxu0 %v446
    %1287 = vmatpush.bf16.msra.mxu0 %v442
    %1288 = vmatmul.bf16.gmra.mxu0 %v1266
    %v1289 = vpop.f32.mrf.mxu0
    %v1290 = vadd.f32 0.0, %v1289
    %v1291 = vpop.f32.mrf.mxu0
    %1292 = vdwg.mxu0
    %1293 = vmatpush.bf16.msra.mxu0 %v471
    %1294 = vmatpush.bf16.msra.mxu0 %v467
    %1295 = vmatpush.bf16.msra.mxu0 %v463
    %1296 = vmatpush.bf16.msra.mxu0 %v459
    %1297 = vmatpush.bf16.msra.mxu0 %v455
    %1298 = vmatpush.bf16.msra.mxu0 %v451
    %1299 = vmatpush.bf16.msra.mxu0 %v447
    %1300 = vmatpush.bf16.msra.mxu0 %v443
    %1301 = vmatmul.bf16.gmra.mxu0 %v1266
    %v1302 = vpop.f32.mrf.mxu0
    %v1303 = vadd.f32 0.0, %v1302
    %v1304 = vpop.f32.mrf.mxu0
    %1305 = vdwg.mxu0
    %1306 = vmatpush.bf16.msra.mxu0 %v472
    %1307 = vmatpush.bf16.msra.mxu0 %v468
    %1308 = vmatpush.bf16.msra.mxu0 %v464
    %1309 = vmatpush.bf16.msra.mxu0 %v460
    %1310 = vmatpush.bf16.msra.mxu0 %v456
    %1311 = vmatpush.bf16.msra.mxu0 %v452
    %1312 = vmatpush.bf16.msra.mxu0 %v448
    %1313 = vmatpush.bf16.msra.mxu0 %v444
    %1314 = vmatmul.bf16.gmra.mxu0 %v1266
    %v1315 = vpop.f32.mrf.mxu0
    %v1316 = vadd.f32 0.0, %v1315
    %v1317 = vpop.f32.mrf.mxu0
    %1318 = vdwg.mxu0
    %v1319 = vadd.f32 %v1262, %v1277
    %v1320 = vadd.f32 %v1263, %v1290
    %v1321 = vadd.f32 %v1264, %v1303
    %v1322 = vadd.f32 %v1265, %v1316
    %v1323 = vxor.u32 %v1319, 2147483648
    %v1324 = vmul.f32 %v1323, 1.442695
    %v1325 = vpow.pop %v1324
    %v1326 = vadd.f32 %v1325, 1.0
    %v1327 = vrcp.pop %v1326
    %v1328 = vmul.f32 %v1326, %v1327
    %v1329 = vsub.f32 1.0, %v1328
    %v1330 = vmul.f32 %v1327, %v1329
    %v1331 = vadd.f32 %v1327, %v1330
    %vm1332 = vweird.f32 %v1326
    %vm1333 = vweird.f32 %v1327
    %vm1334 = vmor %vm1332, %vm1333
    %v1335 = vsel %vm1334, %v1327, %v1331
    %v1336 = vand.u32 2147483647, %v1326
    %vm1337 = vcmp.eq.f32.partialorder %v1336, 8.507059e+37
    %v1338 = vand.u32 %v1326, 2147483648
    %v1339 = vor.u32 1.1754944e-38, %v1338
    %v1340 = vsel %vm1337, %v1339, %v1335
    %v1341 = vmul.f32 1.0, %v1340
    %v1342 = vxor.u32 %v1320, 2147483648
    %v1343 = vmul.f32 %v1342, 1.442695
    %v1344 = vpow.pop %v1343
    %v1345 = vadd.f32 %v1344, 1.0
    %v1346 = vrcp.pop %v1345
    %v1347 = vmul.f32 %v1345, %v1346
    %v1348 = vsub.f32 1.0, %v1347
    %v1349 = vmul.f32 %v1346, %v1348
    %v1350 = vadd.f32 %v1346, %v1349
    %vm1351 = vweird.f32 %v1345
    %vm1352 = vweird.f32 %v1346
    %vm1353 = vmor %vm1351, %vm1352
    %v1354 = vsel %vm1353, %v1346, %v1350
    %v1355 = vand.u32 2147483647, %v1345
    %vm1356 = vcmp.eq.f32.partialorder %v1355, 8.507059e+37
    %v1357 = vand.u32 %v1345, 2147483648
    %v1358 = vor.u32 1.1754944e-38, %v1357
    %v1359 = vsel %vm1356, %v1358, %v1354
    %v1360 = vmul.f32 1.0, %v1359
    %v1361 = vtanh.pop %v1321
    %v1362 = vxor.u32 %v1322, 2147483648
    %v1363 = vmul.f32 %v1362, 1.442695
    %v1364 = vpow.pop %v1363
    %v1365 = vadd.f32 %v1364, 1.0
    %v1366 = vrcp.pop %v1365
    %v1367 = vmul.f32 %v1365, %v1366
    %v1368 = vsub.f32 1.0, %v1367
    %v1369 = vmul.f32 %v1366, %v1368
    %v1370 = vadd.f32 %v1366, %v1369
    %vm1371 = vweird.f32 %v1365
    %vm1372 = vweird.f32 %v1366
    %vm1373 = vmor %vm1371, %vm1372
    %v1374 = vsel %vm1373, %v1366, %v1370
    %v1375 = vand.u32 2147483647, %v1365
    %vm1376 = vcmp.eq.f32.partialorder %v1375, 8.507059e+37
    %v1377 = vand.u32 %v1365, 2147483648
    %v1378 = vor.u32 1.1754944e-38, %v1377
    %v1379 = vsel %vm1376, %v1378, %v1374
    %v1380 = vmul.f32 1.0, %v1379
    %v1381 = vmul.f32 %v1360, %v1256
    %v1382 = vmul.f32 %v1341, %v1361
    %v1383 = vadd.f32 %v1381, %v1382
    %v1384 = vtanh.pop %v1383
    %v1385 = vmul.f32 %v1380, %v1384
    %s1386 = smul.u32 7, 4
    %s1387 = smul.addr %s1386, 8
    %s1388 = scalar_lea.vmem [#allocation2], %s1387
    %v1389 = vld [vmem:[%s1388] sm:$0xff]
    %v1390 = vld [vmem:[%s1388 + $0x8] sm:$0xff]
    %v1391 = vld [vmem:[%s1388 + $0x10] sm:$0xff]
    %v1392 = vld [vmem:[%s1388 + $0x18] sm:$0xff]
    %v1393 = vpack.c.bf16 %v1385, %v1385
    %1394 = vmatpush.bf16.msra.mxu0 %v469
    %1395 = vmatpush.bf16.msra.mxu0 %v465
    %1396 = vmatpush.bf16.msra.mxu0 %v461
    %1397 = vmatpush.bf16.msra.mxu0 %v457
    %1398 = vmatpush.bf16.msra.mxu0 %v453
    %1399 = vmatpush.bf16.msra.mxu0 %v449
    %1400 = vmatpush.bf16.msra.mxu0 %v445
    %1401 = vmatpush.bf16.msra.mxu0 %v441
    %1402 = vmatmul.bf16.gmra.mxu0 %v1393
    %v1403 = vpop.f32.mrf.mxu0
    %v1404 = vadd.f32 0.0, %v1403
    %v1405 = vpop.f32.mrf.mxu0
    %1406 = vdwg.mxu0
    %1407 = vmatpush.bf16.msra.mxu0 %v470
    %1408 = vmatpush.bf16.msra.mxu0 %v466
    %1409 = vmatpush.bf16.msra.mxu0 %v462
    %1410 = vmatpush.bf16.msra.mxu0 %v458
    %1411 = vmatpush.bf16.msra.mxu0 %v454
    %1412 = vmatpush.bf16.msra.mxu0 %v450
    %1413 = vmatpush.bf16.msra.mxu0 %v446
    %1414 = vmatpush.bf16.msra.mxu0 %v442
    %1415 = vmatmul.bf16.gmra.mxu0 %v1393
    %v1416 = vpop.f32.mrf.mxu0
    %v1417 = vadd.f32 0.0, %v1416
    %v1418 = vpop.f32.mrf.mxu0
    %1419 = vdwg.mxu0
    %1420 = vmatpush.bf16.msra.mxu0 %v471
    %1421 = vmatpush.bf16.msra.mxu0 %v467
    %1422 = vmatpush.bf16.msra.mxu0 %v463
    %1423 = vmatpush.bf16.msra.mxu0 %v459
    %1424 = vmatpush.bf16.msra.mxu0 %v455
    %1425 = vmatpush.bf16.msra.mxu0 %v451
    %1426 = vmatpush.bf16.msra.mxu0 %v447
    %1427 = vmatpush.bf16.msra.mxu0 %v443
    %1428 = vmatmul.bf16.gmra.mxu0 %v1393
    %v1429 = vpop.f32.mrf.mxu0
    %v1430 = vadd.f32 0.0, %v1429
    %v1431 = vpop.f32.mrf.mxu0
    %1432 = vdwg.mxu0
    %1433 = vmatpush.bf16.msra.mxu0 %v472
    %1434 = vmatpush.bf16.msra.mxu0 %v468
    %1435 = vmatpush.bf16.msra.mxu0 %v464
    %1436 = vmatpush.bf16.msra.mxu0 %v460
    %1437 = vmatpush.bf16.msra.mxu0 %v456
    %1438 = vmatpush.bf16.msra.mxu0 %v452
    %1439 = vmatpush.bf16.msra.mxu0 %v448
    %1440 = vmatpush.bf16.msra.mxu0 %v444
    %1441 = vmatmul.bf16.gmra.mxu0 %v1393
    %v1442 = vpop.f32.mrf.mxu0
    %v1443 = vadd.f32 0.0, %v1442
    %v1444 = vpop.f32.mrf.mxu0
    %1445 = vdwg.mxu0
    %v1446 = vadd.f32 %v1389, %v1404
    %v1447 = vadd.f32 %v1390, %v1417
    %v1448 = vadd.f32 %v1391, %v1430
    %v1449 = vadd.f32 %v1392, %v1443
    %v1450 = vxor.u32 %v1446, 2147483648
    %v1451 = vmul.f32 %v1450, 1.442695
    %v1452 = vpow.pop %v1451
    %v1453 = vadd.f32 %v1452, 1.0
    %v1454 = vrcp.pop %v1453
    %v1455 = vmul.f32 %v1453, %v1454
    %v1456 = vsub.f32 1.0, %v1455
    %v1457 = vmul.f32 %v1454, %v1456
    %v1458 = vadd.f32 %v1454, %v1457
    %vm1459 = vweird.f32 %v1453
    %vm1460 = vweird.f32 %v1454
    %vm1461 = vmor %vm1459, %vm1460
    %v1462 = vsel %vm1461, %v1454, %v1458
    %v1463 = vand.u32 2147483647, %v1453
    %vm1464 = vcmp.eq.f32.partialorder %v1463, 8.507059e+37
    %v1465 = vand.u32 %v1453, 2147483648
    %v1466 = vor.u32 1.1754944e-38, %v1465
    %v1467 = vsel %vm1464, %v1466, %v1462
    %v1468 = vmul.f32 1.0, %v1467
    %v1469 = vxor.u32 %v1447, 2147483648
    %v1470 = vmul.f32 %v1469, 1.442695
    %v1471 = vpow.pop %v1470
    %v1472 = vadd.f32 %v1471, 1.0
    %v1473 = vrcp.pop %v1472
    %v1474 = vmul.f32 %v1472, %v1473
    %v1475 = vsub.f32 1.0, %v1474
    %v1476 = vmul.f32 %v1473, %v1475
    %v1477 = vadd.f32 %v1473, %v1476
    %vm1478 = vweird.f32 %v1472
    %vm1479 = vweird.f32 %v1473
    %vm1480 = vmor %vm1478, %vm1479
    %v1481 = vsel %vm1480, %v1473, %v1477
    %v1482 = vand.u32 2147483647, %v1472
    %vm1483 = vcmp.eq.f32.partialorder %v1482, 8.507059e+37
    %v1484 = vand.u32 %v1472, 2147483648
    %v1485 = vor.u32 1.1754944e-38, %v1484
    %v1486 = vsel %vm1483, %v1485, %v1481
    %v1487 = vmul.f32 1.0, %v1486
    %v1488 = vtanh.pop %v1448
    %v1489 = vxor.u32 %v1449, 2147483648
    %v1490 = vmul.f32 %v1489, 1.442695
    %v1491 = vpow.pop %v1490
    %v1492 = vadd.f32 %v1491, 1.0
    %v1493 = vrcp.pop %v1492
    %v1494 = vmul.f32 %v1492, %v1493
    %v1495 = vsub.f32 1.0, %v1494
    %v1496 = vmul.f32 %v1493, %v1495
    %v1497 = vadd.f32 %v1493, %v1496
    %vm1498 = vweird.f32 %v1492
    %vm1499 = vweird.f32 %v1493
    %vm1500 = vmor %vm1498, %vm1499
    %v1501 = vsel %vm1500, %v1493, %v1497
    %v1502 = vand.u32 2147483647, %v1492
    %vm1503 = vcmp.eq.f32.partialorder %v1502, 8.507059e+37
    %v1504 = vand.u32 %v1492, 2147483648
    %v1505 = vor.u32 1.1754944e-38, %v1504
    %v1506 = vsel %vm1503, %v1505, %v1501
    %v1507 = vmul.f32 1.0, %v1506
    %v1508 = vmul.f32 %v1487, %v1383
    %v1509 = vmul.f32 %v1468, %v1488
    %v1510 = vadd.f32 %v1508, %v1509
    %v1511 = vtanh.pop %v1510
    %v1512 = vmul.f32 %v1507, %v1511
    %v1513 = vld [vmem:[%s7] ss:$0 sm:$0xff]
    %v1514 = vpack.c.bf16 %v1512, %v1512
    %v1515 = vld [vmem:[%s4] sm:$0xf]
    %v1516 = vld [vmem:[%s4 + $0x4] sm:$0xf]
    %v1517 = vld [vmem:[%s4 + $0x8] sm:$0xf]
    %v1518 = vld [vmem:[%s4 + $0xc] sm:$0xf]
    %v1519 = vld [vmem:[%s4 + $0x10] sm:$0xf]
    %v1520 = vld [vmem:[%s4 + $0x14] sm:$0xf]
    %v1521 = vld [vmem:[%s4 + $0x18] sm:$0xf]
    %v1522 = vld [vmem:[%s4 + $0x1c] sm:$0xf]
    %v1523 = vld [vmem:[%s4 + $0x20] sm:$0xf]
    %v1524 = vld [vmem:[%s4 + $0x24] sm:$0xf]
    %v1525 = vld [vmem:[%s4 + $0x28] sm:$0xf]
    %v1526 = vld [vmem:[%s4 + $0x2c] sm:$0xf]
    %v1527 = vld [vmem:[%s4 + $0x30] sm:$0xf]
    %v1528 = vld [vmem:[%s4 + $0x34] sm:$0xf]
    %v1529 = vld [vmem:[%s4 + $0x38] sm:$0xf]
    %v1530 = vld [vmem:[%s4 + $0x3c] sm:$0xf]
    %v1547 = vunpack.c.l.b16 %v1515
    %v1548 = vunpack.c.l.b16 %v1516
    %v1549 = vunpack.c.l.b16 %v1517
    %v1550 = vunpack.c.l.b16 %v1518
    %v1551 = vunpack.c.l.b16 %v1519
    %v1552 = vunpack.c.l.b16 %v1520
    %v1553 = vunpack.c.l.b16 %v1521
    %v1554 = vunpack.c.l.b16 %v1522
    %v1555 = vunpack.c.l.b16 %v1523
    %v1556 = vunpack.c.l.b16 %v1524
    %v1557 = vunpack.c.l.b16 %v1525
    %v1558 = vunpack.c.l.b16 %v1526
    %v1559 = vunpack.c.l.b16 %v1527
    %v1560 = vunpack.c.l.b16 %v1528
    %v1561 = vunpack.c.l.b16 %v1529
    %v1562 = vunpack.c.l.b16 %v1530
    %v1563 = vpack.c.b16 %v1548, %v1547
    %v1564 = vpack.c.b16 %v1550, %v1549
    %v1565 = vpack.c.b16 %v1552, %v1551
    %v1566 = vpack.c.b16 %v1554, %v1553
    %v1567 = vpack.c.b16 %v1556, %v1555
    %v1568 = vpack.c.b16 %v1558, %v1557
    %v1569 = vpack.c.b16 %v1560, %v1559
    %v1570 = vpack.c.b16 %v1562, %v1561
    %1579 = vmatpush.bf16.msra.mxu0 %v1570
    %1580 = vmatpush.bf16.msra.mxu0 %v1569
    %1581 = vmatpush.bf16.msra.mxu0 %v1568
    %1582 = vmatpush.bf16.msra.mxu0 %v1567
    %1583 = vmatpush.bf16.msra.mxu0 %v1566
    %1584 = vmatpush.bf16.msra.mxu0 %v1565
    %1585 = vmatpush.bf16.msra.mxu0 %v1564
    %1586 = vmatpush.bf16.msra.mxu0 %v1563
    %1587 = vmatmul.bf16.gmra.mxu0 %v1514
    %v1588 = vpop.f32.mrf.mxu0
    %v1589 = vadd.f32 %v1513, %v1588
    %v1590 = vpop.f32.mrf.mxu0
    %1591 = vdwg.mxu0
    %v1592 = vmax.f32 %v1589, 0.0
    %s1593 = scalar_lea.vmem %s7, 1
    %v1594 = vld [vmem:[%s1593] ss:$8 sm:$0xf]
    %v1595 = vpack.c.bf16 %v1592, %v1592
    %v1596 = vld [vmem:[#allocation5] sm:$0xff]
    %v1597 = vld [vmem:[#allocation5 + $0x8] sm:$0xff]
    %v1598 = vld [vmem:[#allocation5 + $0x10] sm:$0xff]
    %v1599 = vld [vmem:[#allocation5 + $0x18] sm:$0xff]
    %v1600 = vld [vmem:[#allocation5 + $0x20] sm:$0xff]
    %v1601 = vld [vmem:[#allocation5 + $0x28] sm:$0xff]
    %v1602 = vld [vmem:[#allocation5 + $0x30] sm:$0xff]
    %v1603 = vld [vmem:[#allocation5 + $0x38] sm:$0xff]
    %v1604 = vld [vmem:[#allocation5 + $0x40] sm:$0xff]
    %v1605 = vld [vmem:[#allocation5 + $0x48] sm:$0xff]
    %v1606 = vld [vmem:[#allocation5 + $0x50] sm:$0xff]
    %v1607 = vld [vmem:[#allocation5 + $0x58] sm:$0xff]
    %v1608 = vld [vmem:[#allocation5 + $0x60] sm:$0xff]
    %v1609 = vld [vmem:[#allocation5 + $0x68] sm:$0xff]
    %v1610 = vld [vmem:[#allocation5 + $0x70] sm:$0xff]
    %v1611 = vld [vmem:[#allocation5 + $0x78] sm:$0xff]
    %v1612 = vld [vmem:[#allocation5 + $0x80] sm:$0xff]
    %v1613 = vld [vmem:[#allocation5 + $0x88] sm:$0xff]
    %v1614 = vld [vmem:[#allocation5 + $0x90] sm:$0xff]
    %v1615 = vld [vmem:[#allocation5 + $0x98] sm:$0xff]
    %v1616 = vld [vmem:[#allocation5 + $0xa0] sm:$0xff]
    %v1617 = vld [vmem:[#allocation5 + $0xa8] sm:$0xff]
    %v1618 = vld [vmem:[#allocation5 + $0xb0] sm:$0xff]
    %v1619 = vld [vmem:[#allocation5 + $0xb8] sm:$0xff]
    %v1620 = vld [vmem:[#allocation5 + $0xc0] sm:$0xff]
    %v1621 = vld [vmem:[#allocation5 + $0xc8] sm:$0xff]
    %v1622 = vld [vmem:[#allocation5 + $0xd0] sm:$0xff]
    %v1623 = vld [vmem:[#allocation5 + $0xd8] sm:$0xff]
    %v1624 = vld [vmem:[#allocation5 + $0xe0] sm:$0xff]
    %v1625 = vld [vmem:[#allocation5 + $0xe8] sm:$0xff]
    %v1626 = vld [vmem:[#allocation5 + $0xf0] sm:$0xff]
    %v1627 = vld [vmem:[#allocation5 + $0xf8] sm:$0xff]
    %v1629 = vperm.slane %v1594, 0
    %v1630 = vperm.slane %v1594, 1
    %v1631 = vperm.slane %v1594, 2
    %v1632 = vperm.slane %v1594, 3
    %v1669 = vunpack.c.l.b16 %v1596
    %v1670 = vunpack.c.h.b16 %v1596
    %v1671 = vunpack.c.l.b16 %v1597
    %v1672 = vunpack.c.h.b16 %v1597
    %v1673 = vunpack.c.l.b16 %v1598
    %v1674 = vunpack.c.h.b16 %v1598
    %v1675 = vunpack.c.l.b16 %v1599
    %v1676 = vunpack.c.h.b16 %v1599
    %v1677 = vunpack.c.l.b16 %v1600
    %v1678 = vunpack.c.h.b16 %v1600
    %v1679 = vunpack.c.l.b16 %v1601
    %v1680 = vunpack.c.h.b16 %v1601
    %v1681 = vunpack.c.l.b16 %v1602
    %v1682 = vunpack.c.h.b16 %v1602
    %v1683 = vunpack.c.l.b16 %v1603
    %v1684 = vunpack.c.h.b16 %v1603
    %v1685 = vunpack.c.l.b16 %v1604
    %v1686 = vunpack.c.h.b16 %v1604
    %v1687 = vunpack.c.l.b16 %v1605
    %v1688 = vunpack.c.h.b16 %v1605
    %v1689 = vunpack.c.l.b16 %v1606
    %v1690 = vunpack.c.h.b16 %v1606
    %v1691 = vunpack.c.l.b16 %v1607
    %v1692 = vunpack.c.h.b16 %v1607
    %v1693 = vunpack.c.l.b16 %v1608
    %v1694 = vunpack.c.h.b16 %v1608
    %v1695 = vunpack.c.l.b16 %v1609
    %v1696 = vunpack.c.h.b16 %v1609
    %v1697 = vunpack.c.l.b16 %v1610
    %v1698 = vunpack.c.h.b16 %v1610
    %v1699 = vunpack.c.l.b16 %v1611
    %v1700 = vunpack.c.h.b16 %v1611
    %v1701 = vunpack.c.l.b16 %v1612
    %v1702 = vunpack.c.h.b16 %v1612
    %v1703 = vunpack.c.l.b16 %v1613
    %v1704 = vunpack.c.h.b16 %v1613
    %v1705 = vunpack.c.l.b16 %v1614
    %v1706 = vunpack.c.h.b16 %v1614
    %v1707 = vunpack.c.l.b16 %v1615
    %v1708 = vunpack.c.h.b16 %v1615
    %v1709 = vunpack.c.l.b16 %v1616
    %v1710 = vunpack.c.h.b16 %v1616
    %v1711 = vunpack.c.l.b16 %v1617
    %v1712 = vunpack.c.h.b16 %v1617
    %v1713 = vunpack.c.l.b16 %v1618
    %v1714 = vunpack.c.h.b16 %v1618
    %v1715 = vunpack.c.l.b16 %v1619
    %v1716 = vunpack.c.h.b16 %v1619
    %v1717 = vunpack.c.l.b16 %v1620
    %v1718 = vunpack.c.h.b16 %v1620
    %v1719 = vunpack.c.l.b16 %v1621
    %v1720 = vunpack.c.h.b16 %v1621
    %v1721 = vunpack.c.l.b16 %v1622
    %v1722 = vunpack.c.h.b16 %v1622
    %v1723 = vunpack.c.l.b16 %v1623
    %v1724 = vunpack.c.h.b16 %v1623
    %v1725 = vunpack.c.l.b16 %v1624
    %v1726 = vunpack.c.h.b16 %v1624
    %v1727 = vunpack.c.l.b16 %v1625
    %v1728 = vunpack.c.h.b16 %v1625
    %v1729 = vunpack.c.l.b16 %v1626
    %v1730 = vunpack.c.h.b16 %v1626
    %v1731 = vunpack.c.l.b16 %v1627
    %v1732 = vunpack.c.h.b16 %v1627
    %v1733 = vpack.c.b16 %v1673, %v1669
    %v1734 = vpack.c.b16 %v1674, %v1670
    %v1735 = vpack.c.b16 %v1675, %v1671
    %v1736 = vpack.c.b16 %v1676, %v1672
    %v1737 = vpack.c.b16 %v1681, %v1677
    %v1738 = vpack.c.b16 %v1682, %v1678
    %v1739 = vpack.c.b16 %v1683, %v1679
    %v1740 = vpack.c.b16 %v1684, %v1680
    %v1741 = vpack.c.b16 %v1689, %v1685
    %v1742 = vpack.c.b16 %v1690, %v1686
    %v1743 = vpack.c.b16 %v1691, %v1687
    %v1744 = vpack.c.b16 %v1692, %v1688
    %v1745 = vpack.c.b16 %v1697, %v1693
    %v1746 = vpack.c.b16 %v1698, %v1694
    %v1747 = vpack.c.b16 %v1699, %v1695
    %v1748 = vpack.c.b16 %v1700, %v1696
    %v1749 = vpack.c.b16 %v1705, %v1701
    %v1750 = vpack.c.b16 %v1706, %v1702
    %v1751 = vpack.c.b16 %v1707, %v1703
    %v1752 = vpack.c.b16 %v1708, %v1704
    %v1753 = vpack.c.b16 %v1713, %v1709
    %v1754 = vpack.c.b16 %v1714, %v1710
    %v1755 = vpack.c.b16 %v1715, %v1711
    %v1756 = vpack.c.b16 %v1716, %v1712
    %v1757 = vpack.c.b16 %v1721, %v1717
    %v1758 = vpack.c.b16 %v1722, %v1718
    %v1759 = vpack.c.b16 %v1723, %v1719
    %v1760 = vpack.c.b16 %v1724, %v1720
    %v1761 = vpack.c.b16 %v1729, %v1725
    %v1762 = vpack.c.b16 %v1730, %v1726
    %v1763 = vpack.c.b16 %v1731, %v1727
    %v1764 = vpack.c.b16 %v1732, %v1728
    %1797 = vmatpush.bf16.msra.mxu0 %v1761
    %1798 = vmatpush.bf16.msra.mxu0 %v1757
    %1799 = vmatpush.bf16.msra.mxu0 %v1753
    %1800 = vmatpush.bf16.msra.mxu0 %v1749
    %1801 = vmatpush.bf16.msra.mxu0 %v1745
    %1802 = vmatpush.bf16.msra.mxu0 %v1741
    %1803 = vmatpush.bf16.msra.mxu0 %v1737
    %1804 = vmatpush.bf16.msra.mxu0 %v1733
    %1805 = vmatmul.bf16.gmra.mxu0 %v1595
    %v1806 = vpop.f32.mrf.mxu0
    %v1807 = vadd.f32 %v1629, %v1806
    %v1808 = vpop.f32.mrf.mxu0
    %1809 = vdwg.mxu0
    %1810 = vmatpush.bf16.msra.mxu0 %v1762
    %1811 = vmatpush.bf16.msra.mxu0 %v1758
    %1812 = vmatpush.bf16.msra.mxu0 %v1754
    %1813 = vmatpush.bf16.msra.mxu0 %v1750
    %1814 = vmatpush.bf16.msra.mxu0 %v1746
    %1815 = vmatpush.bf16.msra.mxu0 %v1742
    %1816 = vmatpush.bf16.msra.mxu0 %v1738
    %1817 = vmatpush.bf16.msra.mxu0 %v1734
    %1818 = vmatmul.bf16.gmra.mxu0 %v1595
    %v1819 = vpop.f32.mrf.mxu0
    %v1820 = vadd.f32 %v1630, %v1819
    %v1821 = vpop.f32.mrf.mxu0
    %1822 = vdwg.mxu0
    %1823 = vmatpush.bf16.msra.mxu0 %v1763
    %1824 = vmatpush.bf16.msra.mxu0 %v1759
    %1825 = vmatpush.bf16.msra.mxu0 %v1755
    %1826 = vmatpush.bf16.msra.mxu0 %v1751
    %1827 = vmatpush.bf16.msra.mxu0 %v1747
    %1828 = vmatpush.bf16.msra.mxu0 %v1743
    %1829 = vmatpush.bf16.msra.mxu0 %v1739
    %1830 = vmatpush.bf16.msra.mxu0 %v1735
    %1831 = vmatmul.bf16.gmra.mxu0 %v1595
    %v1832 = vpop.f32.mrf.mxu0
    %v1833 = vadd.f32 %v1631, %v1832
    %v1834 = vpop.f32.mrf.mxu0
    %1835 = vdwg.mxu0
    %1836 = vmatpush.bf16.msra.mxu0 %v1764
    %1837 = vmatpush.bf16.msra.mxu0 %v1760
    %1838 = vmatpush.bf16.msra.mxu0 %v1756
    %1839 = vmatpush.bf16.msra.mxu0 %v1752
    %1840 = vmatpush.bf16.msra.mxu0 %v1748
    %1841 = vmatpush.bf16.msra.mxu0 %v1744
    %1842 = vmatpush.bf16.msra.mxu0 %v1740
    %1843 = vmatpush.bf16.msra.mxu0 %v1736
    %1844 = vmatmul.bf16.gmra.mxu0 %v1595
    %v1845 = vpop.f32.mrf.mxu0
    %v1846 = vadd.f32 %v1632, %v1845
    %v1847 = vpop.f32.mrf.mxu0
    %1848 = vdwg.mxu0
    %v1849 = vmax.f32 %v1807, 0.0
    %v1850 = vmax.f32 %v1820, 0.0
    %v1851 = vmax.f32 %v1833, 0.0
    %v1852 = vmax.f32 %v1846, 0.0
    %v1853 = vld [vmem:[%s7 + $0x2] ss:$0 sm:$0xff]
    %v1854 = vpack.c.bf16 %v1849, %v1849
    %v1855 = vpack.c.bf16 %v1850, %v1850
    %v1856 = vpack.c.bf16 %v1851, %v1851
    %v1857 = vpack.c.bf16 %v1852, %v1852
    %v1858 = vld [vmem:[#allocation7] sm:$0xf]
    %v1859 = vld [vmem:[#allocation7 + $0x4] sm:$0xf]
    %v1860 = vld [vmem:[#allocation7 + $0x8] sm:$0xf]
    %v1861 = vld [vmem:[#allocation7 + $0xc] sm:$0xf]
    %v1862 = vld [vmem:[#allocation7 + $0x10] sm:$0xf]
    %v1863 = vld [vmem:[#allocation7 + $0x14] sm:$0xf]
    %v1864 = vld [vmem:[#allocation7 + $0x18] sm:$0xf]
    %v1865 = vld [vmem:[#allocation7 + $0x1c] sm:$0xf]
    %v1866 = vld [vmem:[#allocation7 + $0x20] sm:$0xf]
    %v1867 = vld [vmem:[#allocation7 + $0x24] sm:$0xf]
    %v1868 = vld [vmem:[#allocation7 + $0x28] sm:$0xf]
    %v1869 = vld [vmem:[#allocation7 + $0x2c] sm:$0xf]
    %v1870 = vld [vmem:[#allocation7 + $0x30] sm:$0xf]
    %v1871 = vld [vmem:[#allocation7 + $0x34] sm:$0xf]
    %v1872 = vld [vmem:[#allocation7 + $0x38] sm:$0xf]
    %v1873 = vld [vmem:[#allocation7 + $0x3c] sm:$0xf]
    %v1874 = vld [vmem:[#allocation7 + $0x40] sm:$0xf]
    %v1875 = vld [vmem:[#allocation7 + $0x44] sm:$0xf]
    %v1876 = vld [vmem:[#allocation7 + $0x48] sm:$0xf]
    %v1877 = vld [vmem:[#allocation7 + $0x4c] sm:$0xf]
    %v1878 = vld [vmem:[#allocation7 + $0x50] sm:$0xf]
    %v1879 = vld [vmem:[#allocation7 + $0x54] sm:$0xf]
    %v1880 = vld [vmem:[#allocation7 + $0x58] sm:$0xf]
    %v1881 = vld [vmem:[#allocation7 + $0x5c] sm:$0xf]
    %v1882 = vld [vmem:[#allocation7 + $0x60] sm:$0xf]
    %v1883 = vld [vmem:[#allocation7 + $0x64] sm:$0xf]
    %v1884 = vld [vmem:[#allocation7 + $0x68] sm:$0xf]
    %v1885 = vld [vmem:[#allocation7 + $0x6c] sm:$0xf]
    %v1886 = vld [vmem:[#allocation7 + $0x70] sm:$0xf]
    %v1887 = vld [vmem:[#allocation7 + $0x74] sm:$0xf]
    %v1888 = vld [vmem:[#allocation7 + $0x78] sm:$0xf]
    %v1889 = vld [vmem:[#allocation7 + $0x7c] sm:$0xf]
    %v1890 = vld [vmem:[#allocation7 + $0x80] sm:$0xf]
    %v1891 = vld [vmem:[#allocation7 + $0x84] sm:$0xf]
    %v1892 = vld [vmem:[#allocation7 + $0x88] sm:$0xf]
    %v1893 = vld [vmem:[#allocation7 + $0x8c] sm:$0xf]
    %v1894 = vld [vmem:[#allocation7 + $0x90] sm:$0xf]
    %v1895 = vld [vmem:[#allocation7 + $0x94] sm:$0xf]
    %v1896 = vld [vmem:[#allocation7 + $0x98] sm:$0xf]
    %v1897 = vld [vmem:[#allocation7 + $0x9c] sm:$0xf]
    %v1898 = vld [vmem:[#allocation7 + $0xa0] sm:$0xf]
    %v1899 = vld [vmem:[#allocation7 + $0xa4] sm:$0xf]
    %v1900 = vld [vmem:[#allocation7 + $0xa8] sm:$0xf]
    %v1901 = vld [vmem:[#allocation7 + $0xac] sm:$0xf]
    %v1902 = vld [vmem:[#allocation7 + $0xb0] sm:$0xf]
    %v1903 = vld [vmem:[#allocation7 + $0xb4] sm:$0xf]
    %v1904 = vld [vmem:[#allocation7 + $0xb8] sm:$0xf]
    %v1905 = vld [vmem:[#allocation7 + $0xbc] sm:$0xf]
    %v1906 = vld [vmem:[#allocation7 + $0xc0] sm:$0xf]
    %v1907 = vld [vmem:[#allocation7 + $0xc4] sm:$0xf]
    %v1908 = vld [vmem:[#allocation7 + $0xc8] sm:$0xf]
    %v1909 = vld [vmem:[#allocation7 + $0xcc] sm:$0xf]
    %v1910 = vld [vmem:[#allocation7 + $0xd0] sm:$0xf]
    %v1911 = vld [vmem:[#allocation7 + $0xd4] sm:$0xf]
    %v1912 = vld [vmem:[#allocation7 + $0xd8] sm:$0xf]
    %v1913 = vld [vmem:[#allocation7 + $0xdc] sm:$0xf]
    %v1914 = vld [vmem:[#allocation7 + $0xe0] sm:$0xf]
    %v1915 = vld [vmem:[#allocation7 + $0xe4] sm:$0xf]
    %v1916 = vld [vmem:[#allocation7 + $0xe8] sm:$0xf]
    %v1917 = vld [vmem:[#allocation7 + $0xec] sm:$0xf]
    %v1918 = vld [vmem:[#allocation7 + $0xf0] sm:$0xf]
    %v1919 = vld [vmem:[#allocation7 + $0xf4] sm:$0xf]
    %v1920 = vld [vmem:[#allocation7 + $0xf8] sm:$0xf]
    %v1921 = vld [vmem:[#allocation7 + $0xfc] sm:$0xf]
    %v1986 = vunpack.c.l.b16 %v1858
    %v1987 = vunpack.c.l.b16 %v1859
    %v1988 = vunpack.c.l.b16 %v1860
    %v1989 = vunpack.c.l.b16 %v1861
    %v1990 = vunpack.c.l.b16 %v1862
    %v1991 = vunpack.c.l.b16 %v1863
    %v1992 = vunpack.c.l.b16 %v1864
    %v1993 = vunpack.c.l.b16 %v1865
    %v1994 = vunpack.c.l.b16 %v1866
    %v1995 = vunpack.c.l.b16 %v1867
    %v1996 = vunpack.c.l.b16 %v1868
    %v1997 = vunpack.c.l.b16 %v1869
    %v1998 = vunpack.c.l.b16 %v1870
    %v1999 = vunpack.c.l.b16 %v1871
    %v2000 = vunpack.c.l.b16 %v1872
    %v2001 = vunpack.c.l.b16 %v1873
    %v2002 = vunpack.c.l.b16 %v1874
    %v2003 = vunpack.c.l.b16 %v1875
    %v2004 = vunpack.c.l.b16 %v1876
    %v2005 = vunpack.c.l.b16 %v1877
    %v2006 = vunpack.c.l.b16 %v1878
    %v2007 = vunpack.c.l.b16 %v1879
    %v2008 = vunpack.c.l.b16 %v1880
    %v2009 = vunpack.c.l.b16 %v1881
    %v2010 = vunpack.c.l.b16 %v1882
    %v2011 = vunpack.c.l.b16 %v1883
    %v2012 = vunpack.c.l.b16 %v1884
    %v2013 = vunpack.c.l.b16 %v1885
    %v2014 = vunpack.c.l.b16 %v1886
    %v2015 = vunpack.c.l.b16 %v1887
    %v2016 = vunpack.c.l.b16 %v1888
    %v2017 = vunpack.c.l.b16 %v1889
    %v2018 = vunpack.c.l.b16 %v1890
    %v2019 = vunpack.c.l.b16 %v1891
    %v2020 = vunpack.c.l.b16 %v1892
    %v2021 = vunpack.c.l.b16 %v1893
    %v2022 = vunpack.c.l.b16 %v1894
    %v2023 = vunpack.c.l.b16 %v1895
    %v2024 = vunpack.c.l.b16 %v1896
    %v2025 = vunpack.c.l.b16 %v1897
    %v2026 = vunpack.c.l.b16 %v1898
    %v2027 = vunpack.c.l.b16 %v1899
    %v2028 = vunpack.c.l.b16 %v1900
    %v2029 = vunpack.c.l.b16 %v1901
    %v2030 = vunpack.c.l.b16 %v1902
    %v2031 = vunpack.c.l.b16 %v1903
    %v2032 = vunpack.c.l.b16 %v1904
    %v2033 = vunpack.c.l.b16 %v1905
    %v2034 = vunpack.c.l.b16 %v1906
    %v2035 = vunpack.c.l.b16 %v1907
    %v2036 = vunpack.c.l.b16 %v1908
    %v2037 = vunpack.c.l.b16 %v1909
    %v2038 = vunpack.c.l.b16 %v1910
    %v2039 = vunpack.c.l.b16 %v1911
    %v2040 = vunpack.c.l.b16 %v1912
    %v2041 = vunpack.c.l.b16 %v1913
    %v2042 = vunpack.c.l.b16 %v1914
    %v2043 = vunpack.c.l.b16 %v1915
    %v2044 = vunpack.c.l.b16 %v1916
    %v2045 = vunpack.c.l.b16 %v1917
    %v2046 = vunpack.c.l.b16 %v1918
    %v2047 = vunpack.c.l.b16 %v1919
    %v2048 = vunpack.c.l.b16 %v1920
    %v2049 = vunpack.c.l.b16 %v1921
    %v2050 = vpack.c.b16 %v1987, %v1986
    %v2051 = vpack.c.b16 %v1989, %v1988
    %v2052 = vpack.c.b16 %v1991, %v1990
    %v2053 = vpack.c.b16 %v1993, %v1992
    %v2054 = vpack.c.b16 %v1995, %v1994
    %v2055 = vpack.c.b16 %v1997, %v1996
    %v2056 = vpack.c.b16 %v1999, %v1998
    %v2057 = vpack.c.b16 %v2001, %v2000
    %v2058 = vpack.c.b16 %v2003, %v2002
    %v2059 = vpack.c.b16 %v2005, %v2004
    %v2060 = vpack.c.b16 %v2007, %v2006
    %v2061 = vpack.c.b16 %v2009, %v2008
    %v2062 = vpack.c.b16 %v2011, %v2010
    %v2063 = vpack.c.b16 %v2013, %v2012
    %v2064 = vpack.c.b16 %v2015, %v2014
    %v2065 = vpack.c.b16 %v2017, %v2016
    %v2066 = vpack.c.b16 %v2019, %v2018
    %v2067 = vpack.c.b16 %v2021, %v2020
    %v2068 = vpack.c.b16 %v2023, %v2022
    %v2069 = vpack.c.b16 %v2025, %v2024
    %v2070 = vpack.c.b16 %v2027, %v2026
    %v2071 = vpack.c.b16 %v2029, %v2028
    %v2072 = vpack.c.b16 %v2031, %v2030
    %v2073 = vpack.c.b16 %v2033, %v2032
    %v2074 = vpack.c.b16 %v2035, %v2034
    %v2075 = vpack.c.b16 %v2037, %v2036
    %v2076 = vpack.c.b16 %v2039, %v2038
    %v2077 = vpack.c.b16 %v2041, %v2040
    %v2078 = vpack.c.b16 %v2043, %v2042
    %v2079 = vpack.c.b16 %v2045, %v2044
    %v2080 = vpack.c.b16 %v2047, %v2046
    %v2081 = vpack.c.b16 %v2049, %v2048
    %2114 = vmatpush.bf16.msra.mxu0 %v2057
    %2115 = vmatpush.bf16.msra.mxu0 %v2056
    %2116 = vmatpush.bf16.msra.mxu0 %v2055
    %2117 = vmatpush.bf16.msra.mxu0 %v2054
    %2118 = vmatpush.bf16.msra.mxu0 %v2053
    %2119 = vmatpush.bf16.msra.mxu0 %v2052
    %2120 = vmatpush.bf16.msra.mxu0 %v2051
    %2121 = vmatpush.bf16.msra.mxu0 %v2050
    %2122 = vmatmul.bf16.gmra.mxu0 %v1854
    %v2123 = vpop.f32.mrf.mxu0
    %v2124 = vadd.f32 %v1853, %v2123
    %v2125 = vpop.f32.mrf.mxu0
    %2126 = vdwg.mxu0
    %2127 = vmatpush.bf16.msra.mxu0 %v2065
    %2128 = vmatpush.bf16.msra.mxu0 %v2064
    %2129 = vmatpush.bf16.msra.mxu0 %v2063
    %2130 = vmatpush.bf16.msra.mxu0 %v2062
    %2131 = vmatpush.bf16.msra.mxu0 %v2061
    %2132 = vmatpush.bf16.msra.mxu0 %v2060
    %2133 = vmatpush.bf16.msra.mxu0 %v2059
    %2134 = vmatpush.bf16.msra.mxu0 %v2058
    %2135 = vmatmul.bf16.gmra.mxu0 %v1855
    %v2136 = vpop.f32.mrf.mxu0
    %v2137 = vadd.f32 %v2124, %v2136
    %v2138 = vpop.f32.mrf.mxu0
    %2139 = vdwg.mxu0
    %2140 = vmatpush.bf16.msra.mxu0 %v2073
    %2141 = vmatpush.bf16.msra.mxu0 %v2072
    %2142 = vmatpush.bf16.msra.mxu0 %v2071
    %2143 = vmatpush.bf16.msra.mxu0 %v2070
    %2144 = vmatpush.bf16.msra.mxu0 %v2069
    %2145 = vmatpush.bf16.msra.mxu0 %v2068
    %2146 = vmatpush.bf16.msra.mxu0 %v2067
    %2147 = vmatpush.bf16.msra.mxu0 %v2066
    %2148 = vmatmul.bf16.gmra.mxu0 %v1856
    %v2149 = vpop.f32.mrf.mxu0
    %v2150 = vadd.f32 %v2137, %v2149
    %v2151 = vpop.f32.mrf.mxu0
    %2152 = vdwg.mxu0
    %2153 = vmatpush.bf16.msra.mxu0 %v2081
    %2154 = vmatpush.bf16.msra.mxu0 %v2080
    %2155 = vmatpush.bf16.msra.mxu0 %v2079
    %2156 = vmatpush.bf16.msra.mxu0 %v2078
    %2157 = vmatpush.bf16.msra.mxu0 %v2077
    %2158 = vmatpush.bf16.msra.mxu0 %v2076
    %2159 = vmatpush.bf16.msra.mxu0 %v2075
    %2160 = vmatpush.bf16.msra.mxu0 %v2074
    %2161 = vmatmul.bf16.gmra.mxu0 %v1857
    %v2162 = vpop.f32.mrf.mxu0
    %v2163 = vadd.f32 %v2150, %v2162
    %v2164 = vpop.f32.mrf.mxu0
    %2165 = vdwg.mxu0
    %2166 = vst [vmem:[%s8] sm:$0xff] %v2163
    // Predicated region
    $region46: #{performance_predictor_forward.1} parent=1 // pred_check
      _
    $region47: #{performance_predictor_forward.1} parent=1 // pred_check_branch
      %2168 = sbr.rel (0) target = $region49
    $region48: #{performance_predictor_forward.1} parent=1 // pred_region
      _
    $region49: #{performance_predictor_forward.1} parent=1 // pred_fallthru
      _
    // Predicated region
    $region50: #{performance_predictor_forward.1} parent=1 // pred_check
      _
    $region51: #{performance_predictor_forward.1} parent=1 // pred_check_branch
      %2170 = sbr.rel (0) target = $region53
    $region52: #{performance_predictor_forward.1} parent=1 // pred_region
      _
    $region53: #{performance_predictor_forward.1} parent=1 // pred_fallthru
      _
    %2171 = vsyncpa [#allocation4], 1
    %2172 = vsyncpa [#allocation6], 1

</llo_original>
